<compile_context>
chip_gen: v6e
topology: v6e:2x2x1
jax: 0.10.0
libtpu: 0.0.40
codegen_flags: <defaults>
</compile_context>

<pallas_src>
import math
import functools

import jax
import jax.numpy as jnp
from jax.experimental import pallas as pl
from jax.experimental.pallas import tpu as pltpu

LN_EPS = 1e-5  # F.layer_norm default


# ----------------------------- generation-aware sizing -----------------------------

def _device_kind():
    try:
        return jax.devices()[0].device_kind.lower()
    except Exception:
        return ""


def _num_tensorcores():
    kind = _device_kind()
    # v4/v5p (megacore) and v7x expose 2 TensorCores that a 'parallel' grid axis can be
    # sharded over; v5e/v6e are single-TC, so splitting the grid there is pure overhead.
    return 2 if any(t in kind for t in ("v7", "v4", "v5p")) else 1


def _vmem_plan():
    """(per-tile working-set budget, scoped vmem_limit_bytes) per TPU generation."""
    kind = _device_kind()
    if "v7" in kind:                                     # 64 MiB physical VMEM per TC
        return 18 << 20, 48 << 20
    if "v5e" in kind or "v5 lite" in kind or "v5lite" in kind:
        return 28 << 20, 80 << 20                        # 16 MiB scoped default is tiny
    return 40 << 20, 100 << 20                           # v6e & default (128 MiB physical)


def _pick_block_batch(B, C, T, n_heads, vmem_budget, n_cores):
    """Largest divisor of B whose fused tile fits the VMEM budget.

    Folding batches into the matmul M dim makes each projection one big MXU dot.  On
    2-TC chips keep >= n_cores grid steps so the 'parallel' axis can be split across
    cores; on 1-TC chips only VMEM and a ~1024-row M target cap the block.
    """
    def tile_bytes(bt):
        rows = bt * T
        att = 3 * bt * n_heads * T * T * 4      # scores + probs (+ one live temp), f32
        slabs = 8 * rows * C * 4                # x_tc, qkv(3C), o_mc, y, out slabs
        io = 4 * bt * C * T * 4                 # double-buffered input + output tiles
        return att + slabs + io

    best = 1
    for d in range(1, B + 1):
        if B % d:
            continue
        if tile_bytes(d) > vmem_budget:
            continue
        if d * T > 1024 and d > 1:              # M-dim target; larger buys little
            continue
        if n_cores > 1 and B >= n_cores and (B // d) < n_cores:
            continue                            # keep >= n_cores parallel grid steps
        best = d
    return best


# ------------------------------------ kernel ---------------------------------------

def _attention_layer_kernel(lens_ref, x_ref, wqkv_ref, bqkv_ref, wout_ref,
                            bout_ref, gamma_ref, beta_ref, o_ref,
                            *, n_heads, block_b, out_btc, mm_dtype):
    # lens_ref  : (B,) int32 in SMEM (scalar prefetch), per-batch valid length
    # x_ref     : (Bt, C, T) input tile, native NCT layout, f32
    # wqkv_ref  : (C, 3C) qkv weight^T (softmax scale folded into q cols), mm_dtype
    # bqkv_ref  : (1, 3C) f32   wout_ref: (C, C) mm_dtype   bout/gamma/beta: (1, C) f32
    # o_ref     : (Bt, C, T)  or (Bt, T, C) if out_btc
    Bt, H = block_b, n_heads
    C, T = x_ref.shape[1], x_ref.shape[2]
    inter = C // H

    # ---- NCT -> (Bt*T, C): ONE minor-dims transpose + leading-dim collapse ----
    x_tc = jnp.swapaxes(x_ref[...], 1, 2).reshape(Bt * T, C)               # f32

    # ---- QKV projection: one MXU matmul for the whole batch block ----
    #      (bf16 operands / f32 accumulation by default)
    qkv = jnp.dot(x_tc.astype(mm_dtype), wqkv_ref[...],
                  preferred_element_type=jnp.float32) + bqkv_ref[...]      # (Bt*T, 3C) f32
    qkv_mm = qkv.astype(mm_dtype)

    # ---- head split: O(H) static lane slices + leading-dim stack (no O(Bt*H) plumbing,
    #      no general non-minor transposes) ----
    def split_heads(col0):
        cols = [qkv_mm[:, col0 + h * inter: col0 + (h + 1) * inter]
                .reshape(Bt, T, inter) for h in range(H)]
        return jnp.stack(cols, axis=1).reshape(Bt * H, T, inter)           # (Bt*H, T, inter)

    q = split_heads(0)          # softmax scale is pre-folded into the q columns of Wqkv
    k = split_heads(C)
    v = split_heads(2 * C)

    # ---- scores for every (batch, head) pair in one batched MXU dot ----
    scores = jnp.einsum('gtd,gsd->gts', q, k,
                        preferred_element_type=jnp.float32)                # (Bt*H, T, T) f32
    scores = scores.reshape(Bt, H, T, T)

    # ---- padding mask: boolean, broadcast over heads (no H-replicated f32 mask) ----
    base = pl.program_id(0) * Bt
    q_pos = jax.lax.broadcasted_iota(jnp.int32, (T, T), 0)
    k_pos = jax.lax.broadcasted_iota(jnp.int32, (T, T), 1)
    keep = jnp.stack(
        [(q_pos < lens_ref[base + b]) & (k_pos < lens_ref[base + b])
         for b in range(Bt)], axis=0)                                      # (Bt, T, T) bool
    scores = jnp.where(keep[:, None, :, :], scores, -10000.0)              # masked_fill(-1e4)

    # ---- softmax over keys (f32; divide on the EUP) ----
    smax = jnp.max(scores, axis=-1, keepdims=True)
    p = jnp.exp(scores - smax)
    attn = p * pl.reciprocal(jnp.sum(p, axis=-1, keepdims=True), approx=True)

    # ---- attention output: one batched MXU dot over all (batch, head) pairs ----
    o_h = jnp.einsum('gts,gsd->gtd',
                     attn.reshape(Bt * H, T, T).astype(mm_dtype), v,
                     preferred_element_type=jnp.float32)                   # (Bt*H, T, inter)

    # ---- merge heads: O(H) leading slices + one lane-dim concat ----
    o4 = o_h.reshape(Bt, H, T, inter)
    o_mc = jnp.concatenate([o4[:, h] for h in range(H)], axis=-1).reshape(Bt * T, C)

    # ---- output projection + residual + channel LayerNorm (f32) ----
    y = jnp.dot(o_mc.astype(mm_dtype), wout_ref[...],
                preferred_element_type=jnp.float32) + bout_ref[...]        # (Bt*T, C)
    r = x_tc + y
    mean = jnp.mean(r, axis=-1, keepdims=True)
    cen = r - mean
    var = jnp.mean(cen * cen, axis=-1, keepdims=True)
    out = cen * jax.lax.rsqrt(var + LN_EPS) * gamma_ref[...] + beta_ref[...]

    # ---- store ----
    if out_btc:
        # Lane-dense (Bt, T, C) output: unmasked full-vreg stores; wrapper restores NCT.
        o_ref[...] = out.reshape(Bt, T, C).astype(o_ref.dtype)
    else:
        o_ref[...] = jnp.swapaxes(out.reshape(Bt, T, C), 1, 2).astype(o_ref.dtype)


# ------------------------------------ wrapper --------------------------------------

def prepare_attention_params(params, n_heads, mm_dtype=jnp.bfloat16):
    """One-time weight prep, hoisted out of the per-call path.

    Conv1d(kernel=1) weights -> (in, out) matrices, softmax scale folded into the q
    columns (and q bias), matmul operands cast to mm_dtype (bf16 = native MXU dtype)."""
    C = params["w_out"].shape[0]
    inter = C // n_heads
    scale = 1.0 / math.sqrt(inter)
    col_scale = jnp.concatenate(
        [jnp.full((C,), scale, jnp.float32), jnp.ones((2 * C,), jnp.float32)])
    wqkv = jnp.transpose(params["w_qkv"][:, :, 0], (1, 0)).astype(jnp.float32)
    wqkv = wqkv * col_scale[None, :]                                       # (C, 3C)
    bqkv = (params["b_qkv"].astype(jnp.float32) * col_scale).reshape(1, 3 * C)
    wout = jnp.transpose(params["w_out"][:, :, 0], (1, 0)).astype(jnp.float32)
    return {
        "wqkv": wqkv.astype(mm_dtype),
        "bqkv": bqkv,
        "wout": wout.astype(mm_dtype),
        "bout": params["b_out"].reshape(1, C).astype(jnp.float32),
        "gamma": params["gamma"].reshape(1, C).astype(jnp.float32),
        "beta": params["beta"].reshape(1, C).astype(jnp.float32),
    }


def attention_layer_pallas(x_bct, seq_lens, prepared, n_heads):
    """x_bct: (B, C, T) f32.  seq_lens: (B,) int32 valid lengths.
    Padding mask: mask[b,i,j] = (i < len_b) & (j < len_b), applied as
    score.masked_fill(mask == 0, -1e4) exactly like the PyTorch module."""
    B, C, T = x_bct.shape
    mm_dtype = prepared["wqkv"].dtype
    vmem_budget, vmem_limit = _vmem_plan()
    n_cores = _num_tensorcores()
    bt = _pick_block_batch(B, C, T, n_heads, vmem_budget, n_cores)
    out_btc = (C % 128 == 0) and (T % 128 != 0)     # lane-dense store path

    kernel = functools.partial(_attention_layer_kernel, n_heads=n_heads,
                               block_b=bt, out_btc=out_btc, mm_dtype=mm_dtype)

    if out_btc:
        out_shape = jax.ShapeDtypeStruct((B, T, C), jnp.float32)
        out_spec = pl.BlockSpec((bt, T, C), lambda b, lens: (b, 0, 0))
    else:
        out_shape = jax.ShapeDtypeStruct((B, C, T), jnp.float32)
        out_spec = pl.BlockSpec((bt, C, T), lambda b, lens: (b, 0, 0))

    out = pl.pallas_call(
        kernel,
        out_shape=out_shape,
        grid_spec=pltpu.PrefetchScalarGridSpec(
            num_scalar_prefetch=1,
            grid=(B // bt,),
            in_specs=[
                pl.BlockSpec((bt, C, T), lambda b, lens: (b, 0, 0)),   # x (NCT tile)
                pl.BlockSpec((C, 3 * C), lambda b, lens: (0, 0)),      # Wqkv^T (scaled)
                pl.BlockSpec((1, 3 * C), lambda b, lens: (0, 0)),      # bqkv
                pl.BlockSpec((C, C), lambda b, lens: (0, 0)),          # Wout^T
                pl.BlockSpec((1, C), lambda b, lens: (0, 0)),          # bout
                pl.BlockSpec((1, C), lambda b, lens: (0, 0)),          # gamma
                pl.BlockSpec((1, C), lambda b, lens: (0, 0)),          # beta
            ],
            out_specs=out_spec,
        ),
        compiler_params=pltpu.CompilerParams(
            dimension_semantics=("parallel",),
            vmem_limit_bytes=vmem_limit),
    )(seq_lens.astype(jnp.int32), x_bct.astype(jnp.float32),
      prepared["wqkv"], prepared["bqkv"], prepared["wout"],
      prepared["bout"], prepared["gamma"], prepared["beta"])

    if out_btc:
        out = jnp.swapaxes(out, 1, 2)   # consumer-facing NCT
    return out


# ------------------------------------ reference ------------------------------------

def attention_layer_ref(x_bct, attn_mask, params, n_heads):
    """Pure-JAX reference mirroring the PyTorch forward (eval mode)."""
    B, C, T = x_bct.shape
    inter = C // n_heads
    scale = 1.0 / math.sqrt(inter)

    w_qkv = params["w_qkv"][:, :, 0]                              # (3C, C)
    w_out = params["w_out"][:, :, 0]                              # (C, C)

    qkv = jnp.einsum("oc,bct->bot", w_qkv, x_bct) + params["b_qkv"][None, :, None]
    qkv = qkv.reshape(B, 3, n_heads, inter, T)
    qkv = jnp.swapaxes(qkv, -1, -2)                               # (B,3,H,T,inter)
    q, k, v = qkv[:, 0], qkv[:, 1], qkv[:, 2]                     # (B,H,T,inter)

    score = jnp.einsum("bhtd,bhsd->bhts", q, k) * scale
    score = jnp.where(attn_mask == 0, -10000.0, score)
    score = jax.nn.softmax(score, axis=-1)
    o = jnp.einsum("bhts,bhsd->bhtd", score, v)                   # (B,H,T,inter)
    o = jnp.swapaxes(o, -1, -2).reshape(B, C, T)
    o = jnp.einsum("oc,bct->bot", w_out, o) + params["b_out"][None, :, None]

    r = x_bct + o                                                 # residual
    r_tc = jnp.swapaxes(r, 1, 2)                                  # (B, T, C)
    mean = jnp.mean(r_tc, axis=-1, keepdims=True)
    var = jnp.mean((r_tc - mean) ** 2, axis=-1, keepdims=True)
    normed = (r_tc - mean) * jax.lax.rsqrt(var + LN_EPS)
    normed = normed * params["gamma"][None, None, :] + params["beta"][None, None, :]
    return jnp.swapaxes(normed, 1, 2)                             # (B, C, T)


if __name__ == "__main__":
    B, C, T, H = 2, 32, 16, 4

    key = jax.random.PRNGKey(0)
    k_x, k_wq, k_bq, k_wo, k_bo = jax.random.split(key, 5)

    x = jax.random.normal(k_x, (B, C, T), dtype=jnp.float32)
    params = {
        "w_qkv": jax.random.normal(k_wq, (3 * C, C, 1), dtype=jnp.float32) * 0.1,
        "b_qkv": jax.random.normal(k_bq, (3 * C,), dtype=jnp.float32) * 0.1,
        "w_out": jax.random.normal(k_wo, (C, C, 1), dtype=jnp.float32) * 0.1,
        "b_out": jax.random.normal(k_bo, (C,), dtype=jnp.float32) * 0.1,
        "gamma": jnp.ones((C,), dtype=jnp.float32),
        "beta": jnp.zeros((C,), dtype=jnp.float32),
    }
    # per-batch valid lengths (batch 1 has a masked tail of 4 positions)
    seq_lens = jnp.array([T, T - 4], dtype=jnp.int32)

    # dense mask only needed for the pure-JAX reference
    valid = (jnp.arange(T)[None, :] < seq_lens[:, None]).astype(jnp.float32)  # (B, T)
    attn_mask = valid[:, None, :, None] * valid[:, None, None, :]             # (B,1,T,T)
    ref = attention_layer_ref(x, attn_mask, params, H)

    # 1) exact-semantics check: f32 matmul operands
    prep_f32 = prepare_attention_params(params, H, mm_dtype=jnp.float32)
    out_f32 = jax.block_until_ready(attention_layer_pallas(x, seq_lens, prep_f32, H))
    assert out_f32.shape == (B, C, T)
    assert jnp.allclose(out_f32, ref, rtol=5e-3, atol=5e-3), "f32 kernel mismatch"

    # 2) perf path: bf16 MXU operands / f32 accumulation (tolerance widened deliberately
    #    to cover bf16 operand rounding + approx EUP reciprocal)
    prep_bf16 = prepare_attention_params(params, H, mm_dtype=jnp.bfloat16)
    out_bf16 = jax.block_until_ready(attention_layer_pallas(x, seq_lens, prep_bf16, H))
    assert out_bf16.shape == (B, C, T)
    assert jnp.allclose(out_bf16, ref, rtol=3e-2, atol=3e-2), "bf16 kernel mismatch"

    print("KERNEL_OK")
</pallas_src>

<mosaic_0001>
module attributes {stable_mosaic.version = 11 : i64} {
  func.func @_attention_layer_kernel(%arg0: i32, %arg1: memref<2xi32, #tpu.memory_space<smem>>, %arg2: memref<2x32x16xf32, #tpu.memory_space<vmem>>, %arg3: memref<32x96xf32, #tpu.memory_space<vmem>>, %arg4: memref<1x96xf32, #tpu.memory_space<vmem>>, %arg5: memref<32x32xf32, #tpu.memory_space<vmem>>, %arg6: memref<1x32xf32, #tpu.memory_space<vmem>>, %arg7: memref<1x32xf32, #tpu.memory_space<vmem>>, %arg8: memref<1x32xf32, #tpu.memory_space<vmem>>, %arg9: memref<2x32x16xf32, #tpu.memory_space<vmem>>) attributes {dimension_semantics = [#tpu.dimension_semantics<parallel>], iteration_bounds = array<i64: 1>, scalar_prefetch = 1 : i64, scratch_operands = 0 : i64, tpu.core_type = #tpu.core_type<tc>, window_params = [{transform_indices = @transform_0, window_bounds = array<i64: 2, 32, 16>}, {pipeline_mode = #tpu.pipeline_mode<synchronous>, transform_indices = @transform_1, window_bounds = array<i64: 32, 96>}, {pipeline_mode = #tpu.pipeline_mode<synchronous>, transform_indices = @transform_2, window_bounds = array<i64: 1, 96>}, {pipeline_mode = #tpu.pipeline_mode<synchronous>, transform_indices = @transform_3, window_bounds = array<i64: 32, 32>}, {pipeline_mode = #tpu.pipeline_mode<synchronous>, transform_indices = @transform_4, window_bounds = array<i64: 1, 32>}, {pipeline_mode = #tpu.pipeline_mode<synchronous>, transform_indices = @transform_5, window_bounds = array<i64: 1, 32>}, {pipeline_mode = #tpu.pipeline_mode<synchronous>, transform_indices = @transform_6, window_bounds = array<i64: 1, 32>}, {transform_indices = @transform_7, window_bounds = array<i64: 2, 32, 16>}]} {
    %c0 = arith.constant 0 : index
    %c0_0 = arith.constant 0 : index
    %c0_1 = arith.constant 0 : index
    %0 = vector.load %arg2[%c0, %c0_0, %c0_1] : memref<2x32x16xf32, #tpu.memory_space<vmem>>, vector<2x32x16xf32>
    %1 = tpu.transpose %0, [0, 2, 1] : vector<2x32x16xf32> -> vector<2x16x32xf32>
    %2 = vector.shape_cast %1 : vector<2x16x32xf32> to vector<32x32xf32>
    %c0_2 = arith.constant 0 : index
    %c0_3 = arith.constant 0 : index
    %3 = vector.load %arg3[%c0_2, %c0_3] : memref<32x96xf32, #tpu.memory_space<vmem>>, vector<32x96xf32>
    %cst = arith.constant dense<0.000000e+00> : vector<32x96xf32>
    %4 = tpu.matmul %2, %3, %cst {dimension_numbers = #tpu.dot_dimension_numbers<[1], [0], [0], [1], [0, 0, 1, 1], [], []>} : vector<32x32xf32>, vector<32x96xf32>, vector<32x96xf32> -> vector<32x96xf32>
    %c0_4 = arith.constant 0 : index
    %c0_5 = arith.constant 0 : index
    %5 = vector.load %arg4[%c0_4, %c0_5] : memref<1x96xf32, #tpu.memory_space<vmem>>, vector<1x96xf32>
    %6 = vector.broadcast %5 : vector<1x96xf32> to vector<32x96xf32>
    %7 = arith.addf %4, %6 : vector<32x96xf32>
    %8 = vector.extract_strided_slice %7 {offsets = [0, 0], sizes = [32, 8], strides = [1, 1]} : vector<32x96xf32> to vector<32x8xf32>
    %9 = vector.shape_cast %8 : vector<32x8xf32> to vector<2x16x8xf32>
    %10 = vector.extract_strided_slice %7 {offsets = [0, 8], sizes = [32, 8], strides = [1, 1]} : vector<32x96xf32> to vector<32x8xf32>
    %11 = vector.shape_cast %10 : vector<32x8xf32> to vector<2x16x8xf32>
    %12 = vector.extract_strided_slice %7 {offsets = [0, 16], sizes = [32, 8], strides = [1, 1]} : vector<32x96xf32> to vector<32x8xf32>
    %13 = vector.shape_cast %12 : vector<32x8xf32> to vector<2x16x8xf32>
    %14 = vector.extract_strided_slice %7 {offsets = [0, 24], sizes = [32, 8], strides = [1, 1]} : vector<32x96xf32> to vector<32x8xf32>
    %15 = vector.shape_cast %14 : vector<32x8xf32> to vector<2x16x8xf32>
    %16 = vector.shape_cast %9 : vector<2x16x8xf32> to vector<2x1x16x8xf32>
    %17 = vector.shape_cast %11 : vector<2x16x8xf32> to vector<2x1x16x8xf32>
    %18 = vector.shape_cast %13 : vector<2x16x8xf32> to vector<2x1x16x8xf32>
    %19 = vector.shape_cast %15 : vector<2x16x8xf32> to vector<2x1x16x8xf32>
    %20 = tpu.concatenate %16, %17, %18, %19 in 1 : vector<2x1x16x8xf32>, vector<2x1x16x8xf32>, vector<2x1x16x8xf32>, vector<2x1x16x8xf32> -> vector<2x4x16x8xf32>
    %21 = vector.shape_cast %20 : vector<2x4x16x8xf32> to vector<8x16x8xf32>
    %22 = vector.extract_strided_slice %7 {offsets = [0, 32], sizes = [32, 8], strides = [1, 1]} : vector<32x96xf32> to vector<32x8xf32>
    %23 = vector.shape_cast %22 : vector<32x8xf32> to vector<2x16x8xf32>
    %24 = vector.extract_strided_slice %7 {offsets = [0, 40], sizes = [32, 8], strides = [1, 1]} : vector<32x96xf32> to vector<32x8xf32>
    %25 = vector.shape_cast %24 : vector<32x8xf32> to vector<2x16x8xf32>
    %26 = vector.extract_strided_slice %7 {offsets = [0, 48], sizes = [32, 8], strides = [1, 1]} : vector<32x96xf32> to vector<32x8xf32>
    %27 = vector.shape_cast %26 : vector<32x8xf32> to vector<2x16x8xf32>
    %28 = vector.extract_strided_slice %7 {offsets = [0, 56], sizes = [32, 8], strides = [1, 1]} : vector<32x96xf32> to vector<32x8xf32>
    %29 = vector.shape_cast %28 : vector<32x8xf32> to vector<2x16x8xf32>
    %30 = vector.shape_cast %23 : vector<2x16x8xf32> to vector<2x1x16x8xf32>
    %31 = vector.shape_cast %25 : vector<2x16x8xf32> to vector<2x1x16x8xf32>
    %32 = vector.shape_cast %27 : vector<2x16x8xf32> to vector<2x1x16x8xf32>
    %33 = vector.shape_cast %29 : vector<2x16x8xf32> to vector<2x1x16x8xf32>
    %34 = tpu.concatenate %30, %31, %32, %33 in 1 : vector<2x1x16x8xf32>, vector<2x1x16x8xf32>, vector<2x1x16x8xf32>, vector<2x1x16x8xf32> -> vector<2x4x16x8xf32>
    %35 = vector.shape_cast %34 : vector<2x4x16x8xf32> to vector<8x16x8xf32>
    %36 = vector.extract_strided_slice %7 {offsets = [0, 64], sizes = [32, 8], strides = [1, 1]} : vector<32x96xf32> to vector<32x8xf32>
    %37 = vector.shape_cast %36 : vector<32x8xf32> to vector<2x16x8xf32>
    %38 = vector.extract_strided_slice %7 {offsets = [0, 72], sizes = [32, 8], strides = [1, 1]} : vector<32x96xf32> to vector<32x8xf32>
    %39 = vector.shape_cast %38 : vector<32x8xf32> to vector<2x16x8xf32>
    %40 = vector.extract_strided_slice %7 {offsets = [0, 80], sizes = [32, 8], strides = [1, 1]} : vector<32x96xf32> to vector<32x8xf32>
    %41 = vector.shape_cast %40 : vector<32x8xf32> to vector<2x16x8xf32>
    %42 = vector.extract_strided_slice %7 {offsets = [0, 88], sizes = [32, 8], strides = [1, 1]} : vector<32x96xf32> to vector<32x8xf32>
    %43 = vector.shape_cast %42 : vector<32x8xf32> to vector<2x16x8xf32>
    %44 = vector.shape_cast %37 : vector<2x16x8xf32> to vector<2x1x16x8xf32>
    %45 = vector.shape_cast %39 : vector<2x16x8xf32> to vector<2x1x16x8xf32>
    %46 = vector.shape_cast %41 : vector<2x16x8xf32> to vector<2x1x16x8xf32>
    %47 = vector.shape_cast %43 : vector<2x16x8xf32> to vector<2x1x16x8xf32>
    %48 = tpu.concatenate %44, %45, %46, %47 in 1 : vector<2x1x16x8xf32>, vector<2x1x16x8xf32>, vector<2x1x16x8xf32>, vector<2x1x16x8xf32> -> vector<2x4x16x8xf32>
    %49 = vector.shape_cast %48 : vector<2x4x16x8xf32> to vector<8x16x8xf32>
    "tpu.trace_start"() <{level = 10 : i32, message = "gtd,gsd->gts"}> : () -> ()
    %cst_6 = arith.constant dense<0.000000e+00> : vector<8x16x16xf32>
    %50 = tpu.matmul %21, %35, %cst_6 {dimension_numbers = #tpu.dot_dimension_numbers<[2], [2], [1], [1], [0, 0, 0, 1, 1, 1], [0], [0]>} : vector<8x16x8xf32>, vector<8x16x8xf32>, vector<8x16x16xf32> -> vector<8x16x16xf32>
    "tpu.trace_stop"() : () -> ()
    %51 = vector.shape_cast %50 : vector<8x16x16xf32> to vector<2x4x16x16xf32>
    %c2_i32 = arith.constant 2 : i32
    %52 = arith.muli %arg0, %c2_i32 : i32
    %53 = tpu.iota {dimensions = array<i32: 0>} : vector<16x16xi32>
    %54 = tpu.iota {dimensions = array<i32: 1>} : vector<16x16xi32>
    %c0_i32 = arith.constant 0 : i32
    %55 = arith.addi %52, %c0_i32 : i32
    %56 = arith.index_cast %55 : i32 to index
    %57 = memref.load %arg1[%56] : memref<2xi32, #tpu.memory_space<smem>>
    %58 = vector.broadcast %57 : i32 to vector<16x16xi32>
    %59 = arith.cmpi slt, %53, %58 : vector<16x16xi32>
    %c0_i32_7 = arith.constant 0 : i32
    %60 = arith.addi %52, %c0_i32_7 : i32
    %61 = arith.index_cast %60 : i32 to index
    %62 = memref.load %arg1[%61] : memref<2xi32, #tpu.memory_space<smem>>
    %63 = vector.broadcast %62 : i32 to vector<16x16xi32>
    %64 = arith.cmpi slt, %54, %63 : vector<16x16xi32>
    %65 = arith.andi %59, %64 : vector<16x16xi1>
    %c1_i32 = arith.constant 1 : i32
    %66 = arith.addi %52, %c1_i32 : i32
    %67 = arith.index_cast %66 : i32 to index
    %68 = memref.load %arg1[%67] : memref<2xi32, #tpu.memory_space<smem>>
    %69 = vector.broadcast %68 : i32 to vector<16x16xi32>
    %70 = arith.cmpi slt, %53, %69 : vector<16x16xi32>
    %c1_i32_8 = arith.constant 1 : i32
    %71 = arith.addi %52, %c1_i32_8 : i32
    %72 = arith.index_cast %71 : i32 to index
    %73 = memref.load %arg1[%72] : memref<2xi32, #tpu.memory_space<smem>>
    %74 = vector.broadcast %73 : i32 to vector<16x16xi32>
    %75 = arith.cmpi slt, %54, %74 : vector<16x16xi32>
    %76 = arith.andi %70, %75 : vector<16x16xi1>
    %77 = vector.shape_cast %65 : vector<16x16xi1> to vector<1x16x16xi1>
    %78 = vector.shape_cast %76 : vector<16x16xi1> to vector<1x16x16xi1>
    %79 = tpu.concatenate %77, %78 in 0 : vector<1x16x16xi1>, vector<1x16x16xi1> -> vector<2x16x16xi1>
    %80 = vector.shape_cast %79 : vector<2x16x16xi1> to vector<2x1x16x16xi1>
    %cst_9 = arith.constant -1.000000e+04 : f32
    %81 = vector.shape_cast %80 : vector<2x1x16x16xi1> to vector<2x1x16x16xi1>
    %82 = vector.broadcast %81 : vector<2x1x16x16xi1> to vector<2x4x16x16xi1>
    %83 = vector.broadcast %cst_9 : f32 to vector<2x4x16x16xf32>
    %84 = arith.select %82, %51, %83 : vector<2x4x16x16xi1>, vector<2x4x16x16xf32>
    %cst_10 = arith.constant dense<0xFF800000> : vector<2x4x16xf32>
    %85 = vector.multi_reduction <maximumf>, %84, %cst_10 [3] : vector<2x4x16x16xf32> to vector<2x4x16xf32>
    %86 = vector.shape_cast %85 : vector<2x4x16xf32> to vector<2x4x16x1xf32>
    %87 = vector.broadcast %86 : vector<2x4x16x1xf32> to vector<2x4x16x16xf32>
    %88 = arith.subf %84, %87 : vector<2x4x16x16xf32>
    %89 = math.exp %88 : vector<2x4x16x16xf32>
    %cst_11 = arith.constant dense<0.000000e+00> : vector<2x4x16xf32>
    %90 = vector.multi_reduction <add>, %89, %cst_11 [3] : vector<2x4x16x16xf32> to vector<2x4x16xf32>
    %91 = vector.shape_cast %90 : vector<2x4x16xf32> to vector<2x4x16x1xf32>
    %92 = tpu.reciprocal %91 {approx = true} : vector<2x4x16x1xf32> -> vector<2x4x16x1xf32>
    %93 = vector.broadcast %92 : vector<2x4x16x1xf32> to vector<2x4x16x16xf32>
    %94 = arith.mulf %89, %93 : vector<2x4x16x16xf32>
    %95 = vector.shape_cast %94 : vector<2x4x16x16xf32> to vector<8x16x16xf32>
    "tpu.trace_start"() <{level = 10 : i32, message = "gts,gsd->gtd"}> : () -> ()
    %cst_12 = arith.constant dense<0.000000e+00> : vector<8x16x8xf32>
    %96 = tpu.matmul %95, %49, %cst_12 {dimension_numbers = #tpu.dot_dimension_numbers<[2], [1], [1], [2], [0, 0, 0, 1, 1, 2], [0], [0]>} : vector<8x16x16xf32>, vector<8x16x8xf32>, vector<8x16x8xf32> -> vector<8x16x8xf32>
    "tpu.trace_stop"() : () -> ()
    %97 = vector.shape_cast %96 : vector<8x16x8xf32> to vector<2x4x16x8xf32>
    %98 = vector.extract_strided_slice %97 {offsets = [0, 0, 0, 0], sizes = [2, 1, 16, 8], strides = [1, 1, 1, 1]} : vector<2x4x16x8xf32> to vector<2x1x16x8xf32>
    %99 = vector.shape_cast %98 : vector<2x1x16x8xf32> to vector<2x16x8xf32>
    %100 = vector.extract_strided_slice %97 {offsets = [0, 1, 0, 0], sizes = [2, 1, 16, 8], strides = [1, 1, 1, 1]} : vector<2x4x16x8xf32> to vector<2x1x16x8xf32>
    %101 = vector.shape_cast %100 : vector<2x1x16x8xf32> to vector<2x16x8xf32>
    %102 = vector.extract_strided_slice %97 {offsets = [0, 2, 0, 0], sizes = [2, 1, 16, 8], strides = [1, 1, 1, 1]} : vector<2x4x16x8xf32> to vector<2x1x16x8xf32>
    %103 = vector.shape_cast %102 : vector<2x1x16x8xf32> to vector<2x16x8xf32>
    %104 = vector.extract_strided_slice %97 {offsets = [0, 3, 0, 0], sizes = [2, 1, 16, 8], strides = [1, 1, 1, 1]} : vector<2x4x16x8xf32> to vector<2x1x16x8xf32>
    %105 = vector.shape_cast %104 : vector<2x1x16x8xf32> to vector<2x16x8xf32>
    %106 = tpu.concatenate %99, %101, %103, %105 in 2 : vector<2x16x8xf32>, vector<2x16x8xf32>, vector<2x16x8xf32>, vector<2x16x8xf32> -> vector<2x16x32xf32>
    %107 = vector.shape_cast %106 : vector<2x16x32xf32> to vector<32x32xf32>
    %c0_13 = arith.constant 0 : index
    %c0_14 = arith.constant 0 : index
    %108 = vector.load %arg5[%c0_13, %c0_14] : memref<32x32xf32, #tpu.memory_space<vmem>>, vector<32x32xf32>
    %cst_15 = arith.constant dense<0.000000e+00> : vector<32x32xf32>
    %109 = tpu.matmul %107, %108, %cst_15 {dimension_numbers = #tpu.dot_dimension_numbers<[1], [0], [0], [1], [0, 0, 1, 1], [], []>} : vector<32x32xf32>, vector<32x32xf32>, vector<32x32xf32> -> vector<32x32xf32>
    %c0_16 = arith.constant 0 : index
    %c0_17 = arith.constant 0 : index
    %110 = vector.load %arg6[%c0_16, %c0_17] : memref<1x32xf32, #tpu.memory_space<vmem>>, vector<1x32xf32>
    %111 = vector.broadcast %110 : vector<1x32xf32> to vector<32x32xf32>
    %112 = arith.addf %109, %111 : vector<32x32xf32>
    %113 = arith.addf %2, %112 : vector<32x32xf32>
    %cst_18 = arith.constant dense<0.000000e+00> : vector<32xf32>
    %114 = vector.multi_reduction <add>, %113, %cst_18 [1] : vector<32x32xf32> to vector<32xf32>
    %115 = vector.shape_cast %114 : vector<32xf32> to vector<32x1xf32>
    %cst_19 = arith.constant 3.200000e+01 : f32
    %116 = vector.broadcast %cst_19 : f32 to vector<32x1xf32>
    %117 = arith.divf %115, %116 : vector<32x1xf32>
    %118 = vector.broadcast %117 : vector<32x1xf32> to vector<32x32xf32>
    %119 = arith.subf %113, %118 : vector<32x32xf32>
    %120 = arith.mulf %119, %119 : vector<32x32xf32>
    %cst_20 = arith.constant dense<0.000000e+00> : vector<32xf32>
    %121 = vector.multi_reduction <add>, %120, %cst_20 [1] : vector<32x32xf32> to vector<32xf32>
    %122 = vector.shape_cast %121 : vector<32xf32> to vector<32x1xf32>
    %cst_21 = arith.constant 3.200000e+01 : f32
    %123 = vector.broadcast %cst_21 : f32 to vector<32x1xf32>
    %124 = arith.divf %122, %123 : vector<32x1xf32>
    %cst_22 = arith.constant 9.99999974E-6 : f32
    %125 = vector.broadcast %cst_22 : f32 to vector<32x1xf32>
    %126 = arith.addf %124, %125 : vector<32x1xf32>
    %127 = math.rsqrt %126 : vector<32x1xf32>
    %128 = vector.broadcast %127 : vector<32x1xf32> to vector<32x32xf32>
    %129 = arith.mulf %119, %128 : vector<32x32xf32>
    %c0_23 = arith.constant 0 : index
    %c0_24 = arith.constant 0 : index
    %130 = vector.load %arg7[%c0_23, %c0_24] : memref<1x32xf32, #tpu.memory_space<vmem>>, vector<1x32xf32>
    %131 = vector.broadcast %130 : vector<1x32xf32> to vector<32x32xf32>
    %132 = arith.mulf %129, %131 : vector<32x32xf32>
    %c0_25 = arith.constant 0 : index
    %c0_26 = arith.constant 0 : index
    %133 = vector.load %arg8[%c0_25, %c0_26] : memref<1x32xf32, #tpu.memory_space<vmem>>, vector<1x32xf32>
    %134 = vector.broadcast %133 : vector<1x32xf32> to vector<32x32xf32>
    %135 = arith.addf %132, %134 : vector<32x32xf32>
    %136 = vector.shape_cast %135 : vector<32x32xf32> to vector<2x16x32xf32>
    %137 = tpu.transpose %136, [0, 2, 1] : vector<2x16x32xf32> -> vector<2x32x16xf32>
    %c0_27 = arith.constant 0 : index
    %c0_28 = arith.constant 0 : index
    %c0_29 = arith.constant 0 : index
    %138 = vector.load %arg9[%c0_27, %c0_28, %c0_29] : memref<2x32x16xf32, #tpu.memory_space<vmem>>, vector<2x32x16xf32>
    tpu.vector_store %arg9[%c0_27, %c0_28, %c0_29], %137 {strides = array<i32>} : memref<2x32x16xf32, #tpu.memory_space<vmem>>, vector<2x32x16xf32>,
    return
  }
  func.func @transform_0(%arg0: i32, %arg1: memref<2xi32, #tpu.memory_space<smem>>) -> (i32, i32, i32) {
    %c0_i32 = arith.constant 0 : i32
    %c0_i32_0 = arith.constant 0 : i32
    %c0_i32_1 = arith.constant 0 : i32
    return %arg0, %c0_i32, %c0_i32_0 : i32, i32, i32
  }
  func.func @transform_1(%arg0: i32, %arg1: memref<2xi32, #tpu.memory_space<smem>>) -> (i32, i32) {
    %c0_i32 = arith.constant 0 : i32
    %c0_i32_0 = arith.constant 0 : i32
    %c0_i32_1 = arith.constant 0 : i32
    return %c0_i32, %c0_i32_0 : i32, i32
  }
  func.func @transform_2(%arg0: i32, %arg1: memref<2xi32, #tpu.memory_space<smem>>) -> (i32, i32) {
    %c0_i32 = arith.constant 0 : i32
    %c0_i32_0 = arith.constant 0 : i32
    %c0_i32_1 = arith.constant 0 : i32
    return %c0_i32, %c0_i32_0 : i32, i32
  }
  func.func @transform_3(%arg0: i32, %arg1: memref<2xi32, #tpu.memory_space<smem>>) -> (i32, i32) {
    %c0_i32 = arith.constant 0 : i32
    %c0_i32_0 = arith.constant 0 : i32
    %c0_i32_1 = arith.constant 0 : i32
    return %c0_i32, %c0_i32_0 : i32, i32
  }
  func.func @transform_4(%arg0: i32, %arg1: memref<2xi32, #tpu.memory_space<smem>>) -> (i32, i32) {
    %c0_i32 = arith.constant 0 : i32
    %c0_i32_0 = arith.constant 0 : i32
    %c0_i32_1 = arith.constant 0 : i32
    return %c0_i32, %c0_i32_0 : i32, i32
  }
  func.func @transform_5(%arg0: i32, %arg1: memref<2xi32, #tpu.memory_space<smem>>) -> (i32, i32) {
    %c0_i32 = arith.constant 0 : i32
    %c0_i32_0 = arith.constant 0 : i32
    %c0_i32_1 = arith.constant 0 : i32
    return %c0_i32, %c0_i32_0 : i32, i32
  }
  func.func @transform_6(%arg0: i32, %arg1: memref<2xi32, #tpu.memory_space<smem>>) -> (i32, i32) {
    %c0_i32 = arith.constant 0 : i32
    %c0_i32_0 = arith.constant 0 : i32
    %c0_i32_1 = arith.constant 0 : i32
    return %c0_i32, %c0_i32_0 : i32, i32
  }
  func.func @transform_7(%arg0: i32, %arg1: memref<2xi32, #tpu.memory_space<smem>>) -> (i32, i32, i32) {
    %c0_i32 = arith.constant 0 : i32
    %c0_i32_0 = arith.constant 0 : i32
    %c0_i32_1 = arith.constant 0 : i32
    return %arg0, %c0_i32, %c0_i32_0 : i32, i32, i32
  }
}

</mosaic_0001>

<llo_original>
// kernel: tpu_custom_call.1
$region0: #{tpu_custom_call.1}
  #allocation0 [shape = 'u32[]', space=smem, size = 0x4, offset = 0x4, fixed_abs, tag = 'smem constant byte address 0x4 - core index']
  #allocation1 [shape = 'u32[144,128]{1,0:T(1,128)}', space=vmem, size = 0x12000, scoped, tag = 'internal scratch']
  #allocation2 [shape = 's32[1]{0}', space=sflag, size = 0x4, scoped, tag = 'scoped memory for tpu_custom_call.1']
  #allocation3 [shape = 'u8[512]{0}', space=smem, size = 0x200, scoped, tag = 'prefetched SMEM operand 0']
  %s0 = inlined_call_operand.vmem [shape: s32[2], index: 0, kind: input, shape index: {}]
  %s1 = inlined_call_operand.vmem [shape: f32[2,32,16], index: 1, kind: input, shape index: {}]
  %s2 = inlined_call_operand.vmem [shape: f32[32,96], index: 2, kind: input, shape index: {}]
  %s3 = inlined_call_operand.vmem [shape: f32[1,96], index: 3, kind: input, shape index: {}]
  %s4 = inlined_call_operand.vmem [shape: f32[32,32], index: 4, kind: input, shape index: {}]
  %s5 = inlined_call_operand.vmem [shape: f32[1,32], index: 5, kind: input, shape index: {}]
  %s6 = inlined_call_operand.vmem [shape: f32[1,32], index: 6, kind: input, shape index: {}]
  %s7 = inlined_call_operand.vmem [shape: f32[1,32], index: 7, kind: input, shape index: {}]
  %s8 = inlined_call_operand.vmem [shape: f32[2,32,16], index: 8, kind: output, shape index: {}]
  %s9 = sld [smem:[#allocation0]]
  $region38: #{tpu_custom_call.1} parent=0
    _
  %s11 = ssub.s32 1, %s9
  %s12 = scalar_select 0, %s11, %s9
  %s13 = sshll.u32 %s0, 4
  %s14 = int_to_ptr.vmem [resolvable:$true] %s13
  %16 = dma.vmem_to_smem %s14, 16, [#allocation3], [#allocation2]
  %17 = dma.done [#allocation2], 16
  %18 = sfence
  // Predicated region
  $region2: #{tpu_custom_call.1} parent=0 // pred_check
    _
  $region3: #{tpu_custom_call.1} parent=0 // pred_check_branch
    %20 = sbr.rel (0) target = $region5
  $region4: #{tpu_custom_call.1} parent=0 // pred_region
    _
  $region5: #{tpu_custom_call.1} parent=0 // pred_fallthru
    _
  // Predicated region
  $region6: #{tpu_custom_call.1} parent=0 // pred_check
    _
  $region7: #{tpu_custom_call.1} parent=0 // pred_check_branch
    %22 = sbr.rel (0) target = $region9
  $region8: #{tpu_custom_call.1} parent=0 // pred_region
    _
  $region9: #{tpu_custom_call.1} parent=0 // pred_fallthru
    _
  // Predicated region
  $region10: #{tpu_custom_call.1} parent=0 // pred_check
    _
  $region11: #{tpu_custom_call.1} parent=0 // pred_check_branch
    %24 = sbr.rel (0) target = $region13
  $region12: #{tpu_custom_call.1} parent=0 // pred_region
    _
  $region13: #{tpu_custom_call.1} parent=0 // pred_fallthru
    _
  // Predicated region
  $region14: #{tpu_custom_call.1} parent=0 // pred_check
    _
  $region15: #{tpu_custom_call.1} parent=0 // pred_check_branch
    %26 = sbr.rel (0) target = $region17
  $region16: #{tpu_custom_call.1} parent=0 // pred_region
    _
  $region17: #{tpu_custom_call.1} parent=0 // pred_fallthru
    _
  // Predicated region
  $region18: #{tpu_custom_call.1} parent=0 // pred_check
    _
  $region19: #{tpu_custom_call.1} parent=0 // pred_check_branch
    %28 = sbr.rel (0) target = $region21
  $region20: #{tpu_custom_call.1} parent=0 // pred_region
    _
  $region21: #{tpu_custom_call.1} parent=0 // pred_fallthru
    _
  // Predicated region
  $region22: #{tpu_custom_call.1} parent=0 // pred_check
    _
  $region23: #{tpu_custom_call.1} parent=0 // pred_check_branch
    %30 = sbr.rel (0) target = $region25
  $region24: #{tpu_custom_call.1} parent=0 // pred_region
    _
  $region25: #{tpu_custom_call.1} parent=0 // pred_fallthru
    _
  // Predicated region
  $region26: #{tpu_custom_call.1} parent=0 // pred_check
    _
  $region27: #{tpu_custom_call.1} parent=0 // pred_check_branch
    %32 = sbr.rel (0) target = $region29
  $region28: #{tpu_custom_call.1} parent=0 // pred_region
    _
  $region29: #{tpu_custom_call.1} parent=0 // pred_fallthru
    _
  %v33 = vld [vmem:[%s1] sm:$0xff]
  %v34 = vld [vmem:[%s1 + $0x8] sm:$0xff]
  %v35 = vld [vmem:[%s1 + $0x10] sm:$0xff]
  %v36 = vld [vmem:[%s1 + $0x18] sm:$0xff]
  %v37 = vld [vmem:[%s1 + $0x20] sm:$0xff]
  %v38 = vld [vmem:[%s1 + $0x28] sm:$0xff]
  %v39 = vld [vmem:[%s1 + $0x30] sm:$0xff]
  %v40 = vld [vmem:[%s1 + $0x38] sm:$0xff]
  %41 = vxpose.xlu0.b32.start [1/16] %v33, 128
  %42 = vxpose.xlu0.b32.cont [2/16] %v34, 128
  %43 = vxpose.xlu0.b32.cont [3/16] %v35, 128
  %44 = vxpose.xlu0.b32.cont [4/16] %v36, 128
  %45 = vxpose.xlu0.b32.cont [5/16] 0.0, 128
  %46 = vxpose.xlu0.b32.cont [6/16] 0.0, 128
  %47 = vxpose.xlu0.b32.cont [7/16] 0.0, 128
  %48 = vxpose.xlu0.b32.cont [8/16] 0.0, 128
  %49 = vxpose.xlu0.b32.cont [9/16] 0.0, 128
  %50 = vxpose.xlu0.b32.cont [10/16] 0.0, 128
  %51 = vxpose.xlu0.b32.cont [11/16] 0.0, 128
  %52 = vxpose.xlu0.b32.cont [12/16] 0.0, 128
  %53 = vxpose.xlu0.b32.cont [13/16] 0.0, 128
  %54 = vxpose.xlu0.b32.cont [14/16] 0.0, 128
  %55 = vxpose.xlu0.b32.cont [15/16] 0.0, 128
  %56 = vxpose.xlu0.b32.end [16/16] 0.0, 128
  %v57 = vpop.trf.xlu0
  %v58 = vpop.trf.xlu0
  %v59 = vpop.trf.xlu0
  %v60 = vpop.trf.xlu0
  %v61 = vpop.trf.xlu0
  %v62 = vpop.trf.xlu0
  %v63 = vpop.trf.xlu0
  %v64 = vpop.trf.xlu0
  %v65 = vpop.trf.xlu0
  %v66 = vpop.trf.xlu0
  %v67 = vpop.trf.xlu0
  %v68 = vpop.trf.xlu0
  %v69 = vpop.trf.xlu0
  %v70 = vpop.trf.xlu0
  %v71 = vpop.trf.xlu0
  %v72 = vpop.trf.xlu0
  %73 = vxpose.xlu0.b32.start [1/16] %v37, 128
  %74 = vxpose.xlu0.b32.cont [2/16] %v38, 128
  %75 = vxpose.xlu0.b32.cont [3/16] %v39, 128
  %76 = vxpose.xlu0.b32.cont [4/16] %v40, 128
  %77 = vxpose.xlu0.b32.cont [5/16] 0.0, 128
  %78 = vxpose.xlu0.b32.cont [6/16] 0.0, 128
  %79 = vxpose.xlu0.b32.cont [7/16] 0.0, 128
  %80 = vxpose.xlu0.b32.cont [8/16] 0.0, 128
  %81 = vxpose.xlu0.b32.cont [9/16] 0.0, 128
  %82 = vxpose.xlu0.b32.cont [10/16] 0.0, 128
  %83 = vxpose.xlu0.b32.cont [11/16] 0.0, 128
  %84 = vxpose.xlu0.b32.cont [12/16] 0.0, 128
  %85 = vxpose.xlu0.b32.cont [13/16] 0.0, 128
  %86 = vxpose.xlu0.b32.cont [14/16] 0.0, 128
  %87 = vxpose.xlu0.b32.cont [15/16] 0.0, 128
  %88 = vxpose.xlu0.b32.end [16/16] 0.0, 128
  %v89 = vpop.trf.xlu0
  %v90 = vpop.trf.xlu0
  %v91 = vpop.trf.xlu0
  %v92 = vpop.trf.xlu0
  %v93 = vpop.trf.xlu0
  %v94 = vpop.trf.xlu0
  %v95 = vpop.trf.xlu0
  %v96 = vpop.trf.xlu0
  %v97 = vpop.trf.xlu0
  %v98 = vpop.trf.xlu0
  %v99 = vpop.trf.xlu0
  %v100 = vpop.trf.xlu0
  %v101 = vpop.trf.xlu0
  %v102 = vpop.trf.xlu0
  %v103 = vpop.trf.xlu0
  %v104 = vpop.trf.xlu0
  %v105 = vld [vmem:[%s2] sm:$0xff]
  %v106 = vld [vmem:[%s2 + $0x8] sm:$0xff]
  %v107 = vld [vmem:[%s2 + $0x10] sm:$0xff]
  %v108 = vld [vmem:[%s2 + $0x18] sm:$0xff]
  %v109 = vld [vmem:[%s3] sm:$0x1]
  %v111 = vlaneseq
  %v112 = vshrl.u32 %v111, 7
  %v113 = vsub.s32 0, %v112
  %v114 = vrot.slane %v109, %v113
  %vm116 = vcmask 261120
  %v118 = vsel %vm116, %v57, 0
  %v121 = vsel %vm116, %v58, 0
  %v124 = vsel %vm116, %v89, 0
  %v127 = vsel %vm116, %v90, 0
  %129 = vmatprep.subr.mxu0 0.0
  %130 = vmatpush1.msra.mxu0 0.0
  %131 = vmatprep.subr.mxu0 0.0
  %132 = vmatpush1.msra.mxu0 0.0
  %133 = vmatprep.subr.mxu0 0.0
  %134 = vmatpush1.msra.mxu0 0.0
  %135 = vmatprep.subr.mxu0 0.0
  %136 = vmatpush1.msra.mxu0 0.0
  %137 = vmatprep.subr.mxu0 0.0
  %138 = vmatpush1.msra.mxu0 0.0
  %139 = vmatprep.subr.mxu0 0.0
  %140 = vmatpush1.msra.mxu0 0.0
  %141 = vmatprep.subr.mxu0 0.0
  %142 = vmatpush1.msra.mxu0 0.0
  %143 = vmatprep.subr.mxu0 0.0
  %144 = vmatpush1.msra.mxu0 0.0
  %145 = vmatprep.subr.mxu0 0.0
  %146 = vmatpush1.msra.mxu0 0.0
  %147 = vmatprep.subr.mxu0 0.0
  %148 = vmatpush1.msra.mxu0 0.0
  %149 = vmatprep.subr.mxu0 0.0
  %150 = vmatpush1.msra.mxu0 0.0
  %151 = vmatprep.subr.mxu0 0.0
  %152 = vmatpush1.msra.mxu0 0.0
  %153 = vmatprep.subr.mxu0 0.0
  %154 = vmatpush1.msra.mxu0 %v108
  %155 = vmatprep.subr.mxu0 0.0
  %156 = vmatpush1.msra.mxu0 %v107
  %157 = vmatprep.subr.mxu0 0.0
  %158 = vmatpush1.msra.mxu0 %v106
  %159 = vmatprep.subr.mxu0 0.0
  %160 = vmatpush1.msra.mxu0 %v105
  %161 = vmatprep.subr.mxu0 0.0
  %162 = vmatpush2.msra.mxu0 0.0
  %163 = vmatprep.subr.mxu0 0.0
  %164 = vmatpush2.msra.mxu0 0.0
  %165 = vmatprep.subr.mxu0 0.0
  %166 = vmatpush2.msra.mxu0 0.0
  %167 = vmatprep.subr.mxu0 0.0
  %168 = vmatpush2.msra.mxu0 0.0
  %169 = vmatprep.subr.mxu0 0.0
  %170 = vmatpush2.msra.mxu0 0.0
  %171 = vmatprep.subr.mxu0 0.0
  %172 = vmatpush2.msra.mxu0 0.0
  %173 = vmatprep.subr.mxu0 0.0
  %174 = vmatpush2.msra.mxu0 0.0
  %175 = vmatprep.subr.mxu0 0.0
  %176 = vmatpush2.msra.mxu0 0.0
  %177 = vmatprep.subr.mxu0 0.0
  %178 = vmatpush2.msra.mxu0 0.0
  %179 = vmatprep.subr.mxu0 0.0
  %180 = vmatpush2.msra.mxu0 0.0
  %181 = vmatprep.subr.mxu0 0.0
  %182 = vmatpush2.msra.mxu0 0.0
  %183 = vmatprep.subr.mxu0 0.0
  %184 = vmatpush2.msra.mxu0 0.0
  %185 = vmatprep.subr.mxu0 0.0
  %186 = vmatpush2.msra.mxu0 0.0
  %187 = vmatprep.subr.mxu0 0.0
  %188 = vmatpush2.msra.mxu0 0.0
  %189 = vmatprep.subr.mxu0 0.0
  %190 = vmatpush2.msra.mxu0 0.0
  %191 = vmatprep.subr.mxu0 0.0
  %192 = vmatpush2.msra.mxu0 0.0
  %193 = vmatprep.mubr.f32.mxu0 0.0
  %194 = vmatmul.mubr.f32.gmra.mxu0 %v118
  %v195 = vpop.f32.mrf.mxu0
  %v196 = vadd.f32 %v114, %v195
  %v197 = vpop.f32.mrf.mxu0
  %198 = vmatprep.mubr.f32.mxu0 0.0
  %199 = vmatmul.mubr.f32.gmra.mxu0 %v121
  %v200 = vpop.f32.mrf.mxu0
  %v201 = vadd.f32 %v114, %v200
  %v202 = vpop.f32.mrf.mxu0
  %203 = vmatprep.mubr.f32.mxu0 0.0
  %204 = vmatmul.mubr.f32.gmra.mxu0 %v124
  %v205 = vpop.f32.mrf.mxu0
  %v206 = vadd.f32 %v114, %v205
  %v207 = vpop.f32.mrf.mxu0
  %208 = vmatprep.mubr.f32.mxu0 0.0
  %209 = vmatmul.mubr.f32.gmra.mxu0 %v127
  %v210 = vpop.f32.mrf.mxu0
  %v211 = vadd.f32 %v114, %v210
  %v212 = vpop.f32.mrf.mxu0
  %213 = vdwg.mxu0
  %218 = vrot.lane.b32.xlu0 %v196, 120
  %v219 = vpop.permute.xlu0 %218
  %220 = vrot.lane.b32.xlu0 %v201, 120
  %v221 = vpop.permute.xlu0 %220
  %222 = vrot.lane.b32.xlu0 %v206, 120
  %v223 = vpop.permute.xlu0 %222
  %224 = vrot.lane.b32.xlu0 %v211, 120
  %v225 = vpop.permute.xlu0 %224
  %226 = vrot.lane.b32.xlu0 %v196, 112
  %v227 = vpop.permute.xlu0 %226
  %228 = vrot.lane.b32.xlu0 %v201, 112
  %v229 = vpop.permute.xlu0 %228
  %230 = vrot.lane.b32.xlu0 %v206, 112
  %v231 = vpop.permute.xlu0 %230
  %232 = vrot.lane.b32.xlu0 %v211, 112
  %v233 = vpop.permute.xlu0 %232
  %234 = vrot.lane.b32.xlu0 %v196, 104
  %v235 = vpop.permute.xlu0 %234
  %236 = vrot.lane.b32.xlu0 %v201, 104
  %v237 = vpop.permute.xlu0 %236
  %238 = vrot.lane.b32.xlu0 %v206, 104
  %v239 = vpop.permute.xlu0 %238
  %240 = vrot.lane.b32.xlu0 %v211, 104
  %v241 = vpop.permute.xlu0 %240
  %242 = vrot.lane.b32.xlu0 %v196, 96
  %v243 = vpop.permute.xlu0 %242
  %244 = vrot.lane.b32.xlu0 %v201, 96
  %v245 = vpop.permute.xlu0 %244
  %vm246 = vcmask 64512
  %v247 = vsel %vm246, %v196, 0
  %v249 = vsel %vm246, %v201, 0
  %v251 = vsel %vm246, %v243, 0
  %v253 = vsel %vm246, %v245, 0
  %255 = vmatprep.subr.mxu0 0.0
  %256 = vmatpush1.xpose.msra.mxu0 0.0
  %257 = vmatprep.subr.mxu0 0.0
  %258 = vmatpush1.xpose.msra.mxu0 0.0
  %259 = vmatprep.subr.mxu0 0.0
  %260 = vmatpush1.xpose.msra.mxu0 0.0
  %261 = vmatprep.subr.mxu0 0.0
  %262 = vmatpush1.xpose.msra.mxu0 0.0
  %263 = vmatprep.subr.mxu0 0.0
  %264 = vmatpush1.xpose.msra.mxu0 0.0
  %265 = vmatprep.subr.mxu0 0.0
  %266 = vmatpush1.xpose.msra.mxu0 0.0
  %267 = vmatprep.subr.mxu0 0.0
  %268 = vmatpush1.xpose.msra.mxu0 0.0
  %269 = vmatprep.subr.mxu0 0.0
  %270 = vmatpush1.xpose.msra.mxu0 0.0
  %271 = vmatprep.subr.mxu0 0.0
  %272 = vmatpush1.xpose.msra.mxu0 0.0
  %273 = vmatprep.subr.mxu0 0.0
  %274 = vmatpush1.xpose.msra.mxu0 0.0
  %275 = vmatprep.subr.mxu0 0.0
  %276 = vmatpush1.xpose.msra.mxu0 0.0
  %277 = vmatprep.subr.mxu0 0.0
  %278 = vmatpush1.xpose.msra.mxu0 0.0
  %279 = vmatprep.subr.mxu0 0.0
  %280 = vmatpush1.xpose.msra.mxu0 0.0
  %281 = vmatprep.subr.mxu0 0.0
  %282 = vmatpush1.xpose.msra.mxu0 0.0
  %283 = vmatprep.subr.mxu0 0.0
  %284 = vmatpush1.xpose.msra.mxu0 %v253
  %285 = vmatprep.subr.mxu0 0.0
  %286 = vmatpush1.xpose.msra.mxu0 %v251
  %287 = vmatprep.subr.mxu0 0.0
  %288 = vmatpush2.xpose.msra.mxu0 0.0
  %289 = vmatprep.subr.mxu0 0.0
  %290 = vmatpush2.xpose.msra.mxu0 0.0
  %291 = vmatprep.subr.mxu0 0.0
  %292 = vmatpush2.xpose.msra.mxu0 0.0
  %293 = vmatprep.subr.mxu0 0.0
  %294 = vmatpush2.xpose.msra.mxu0 0.0
  %295 = vmatprep.subr.mxu0 0.0
  %296 = vmatpush2.xpose.msra.mxu0 0.0
  %297 = vmatprep.subr.mxu0 0.0
  %298 = vmatpush2.xpose.msra.mxu0 0.0
  %299 = vmatprep.subr.mxu0 0.0
  %300 = vmatpush2.xpose.msra.mxu0 0.0
  %301 = vmatprep.subr.mxu0 0.0
  %302 = vmatpush2.xpose.msra.mxu0 0.0
  %303 = vmatprep.subr.mxu0 0.0
  %304 = vmatpush2.xpose.msra.mxu0 0.0
  %305 = vmatprep.subr.mxu0 0.0
  %306 = vmatpush2.xpose.msra.mxu0 0.0
  %307 = vmatprep.subr.mxu0 0.0
  %308 = vmatpush2.xpose.msra.mxu0 0.0
  %309 = vmatprep.subr.mxu0 0.0
  %310 = vmatpush2.xpose.msra.mxu0 0.0
  %311 = vmatprep.subr.mxu0 0.0
  %312 = vmatpush2.xpose.msra.mxu0 0.0
  %313 = vmatprep.subr.mxu0 0.0
  %314 = vmatpush2.xpose.msra.mxu0 0.0
  %315 = vmatprep.subr.mxu0 0.0
  %316 = vmatpush2.xpose.msra.mxu0 0.0
  %317 = vmatprep.subr.mxu0 0.0
  %318 = vmatpush2.xpose.msra.mxu0 0.0
  %319 = vmatprep.mubr.f32.mxu0 0.0
  %320 = vmatmul.mubr.f32.gmra.mxu0 %v247
  %v321 = vpop.f32.mrf.mxu0
  %v322 = vadd.f32 0.0, %v321
  %v323 = vpop.f32.mrf.mxu0
  %324 = vmatprep.mubr.f32.mxu0 0.0
  %325 = vmatmul.mubr.f32.gmra.mxu0 %v249
  %v326 = vpop.f32.mrf.mxu0
  %v327 = vadd.f32 0.0, %v326
  %v328 = vpop.f32.mrf.mxu0
  %329 = vdwg.mxu0
  %330 = vrot.lane.b32.xlu0 %v219, 96
  %v331 = vpop.permute.xlu0 %330
  %332 = vrot.lane.b32.xlu0 %v221, 96
  %v333 = vpop.permute.xlu0 %332
  %v334 = vsel %vm246, %v219, 0
  %v336 = vsel %vm246, %v221, 0
  %v338 = vsel %vm246, %v331, 0
  %v340 = vsel %vm246, %v333, 0
  %342 = vmatprep.subr.mxu0 0.0
  %343 = vmatpush1.xpose.msra.mxu0 0.0
  %344 = vmatprep.subr.mxu0 0.0
  %345 = vmatpush1.xpose.msra.mxu0 0.0
  %346 = vmatprep.subr.mxu0 0.0
  %347 = vmatpush1.xpose.msra.mxu0 0.0
  %348 = vmatprep.subr.mxu0 0.0
  %349 = vmatpush1.xpose.msra.mxu0 0.0
  %350 = vmatprep.subr.mxu0 0.0
  %351 = vmatpush1.xpose.msra.mxu0 0.0
  %352 = vmatprep.subr.mxu0 0.0
  %353 = vmatpush1.xpose.msra.mxu0 0.0
  %354 = vmatprep.subr.mxu0 0.0
  %355 = vmatpush1.xpose.msra.mxu0 0.0
  %356 = vmatprep.subr.mxu0 0.0
  %357 = vmatpush1.xpose.msra.mxu0 0.0
  %358 = vmatprep.subr.mxu0 0.0
  %359 = vmatpush1.xpose.msra.mxu0 0.0
  %360 = vmatprep.subr.mxu0 0.0
  %361 = vmatpush1.xpose.msra.mxu0 0.0
  %362 = vmatprep.subr.mxu0 0.0
  %363 = vmatpush1.xpose.msra.mxu0 0.0
  %364 = vmatprep.subr.mxu0 0.0
  %365 = vmatpush1.xpose.msra.mxu0 0.0
  %366 = vmatprep.subr.mxu0 0.0
  %367 = vmatpush1.xpose.msra.mxu0 0.0
  %368 = vmatprep.subr.mxu0 0.0
  %369 = vmatpush1.xpose.msra.mxu0 0.0
  %370 = vmatprep.subr.mxu0 0.0
  %371 = vmatpush1.xpose.msra.mxu0 %v340
  %372 = vmatprep.subr.mxu0 0.0
  %373 = vmatpush1.xpose.msra.mxu0 %v338
  %374 = vmatprep.subr.mxu0 0.0
  %375 = vmatpush2.xpose.msra.mxu0 0.0
  %376 = vmatprep.subr.mxu0 0.0
  %377 = vmatpush2.xpose.msra.mxu0 0.0
  %378 = vmatprep.subr.mxu0 0.0
  %379 = vmatpush2.xpose.msra.mxu0 0.0
  %380 = vmatprep.subr.mxu0 0.0
  %381 = vmatpush2.xpose.msra.mxu0 0.0
  %382 = vmatprep.subr.mxu0 0.0
  %383 = vmatpush2.xpose.msra.mxu0 0.0
  %384 = vmatprep.subr.mxu0 0.0
  %385 = vmatpush2.xpose.msra.mxu0 0.0
  %386 = vmatprep.subr.mxu0 0.0
  %387 = vmatpush2.xpose.msra.mxu0 0.0
  %388 = vmatprep.subr.mxu0 0.0
  %389 = vmatpush2.xpose.msra.mxu0 0.0
  %390 = vmatprep.subr.mxu0 0.0
  %391 = vmatpush2.xpose.msra.mxu0 0.0
  %392 = vmatprep.subr.mxu0 0.0
  %393 = vmatpush2.xpose.msra.mxu0 0.0
  %394 = vmatprep.subr.mxu0 0.0
  %395 = vmatpush2.xpose.msra.mxu0 0.0
  %396 = vmatprep.subr.mxu0 0.0
  %397 = vmatpush2.xpose.msra.mxu0 0.0
  %398 = vmatprep.subr.mxu0 0.0
  %399 = vmatpush2.xpose.msra.mxu0 0.0
  %400 = vmatprep.subr.mxu0 0.0
  %401 = vmatpush2.xpose.msra.mxu0 0.0
  %402 = vmatprep.subr.mxu0 0.0
  %403 = vmatpush2.xpose.msra.mxu0 0.0
  %404 = vmatprep.subr.mxu0 0.0
  %405 = vmatpush2.xpose.msra.mxu0 0.0
  %406 = vmatprep.mubr.f32.mxu0 0.0
  %407 = vmatmul.mubr.f32.gmra.mxu0 %v334
  %v408 = vpop.f32.mrf.mxu0
  %v409 = vadd.f32 0.0, %v408
  %v410 = vpop.f32.mrf.mxu0
  %411 = vmatprep.mubr.f32.mxu0 0.0
  %412 = vmatmul.mubr.f32.gmra.mxu0 %v336
  %v413 = vpop.f32.mrf.mxu0
  %v414 = vadd.f32 0.0, %v413
  %v415 = vpop.f32.mrf.mxu0
  %416 = vdwg.mxu0
  %417 = vrot.lane.b32.xlu0 %v227, 96
  %v418 = vpop.permute.xlu0 %417
  %419 = vrot.lane.b32.xlu0 %v229, 96
  %v420 = vpop.permute.xlu0 %419
  %v421 = vsel %vm246, %v227, 0
  %v423 = vsel %vm246, %v229, 0
  %v425 = vsel %vm246, %v418, 0
  %v427 = vsel %vm246, %v420, 0
  %429 = vmatprep.subr.mxu0 0.0
  %430 = vmatpush1.xpose.msra.mxu0 0.0
  %431 = vmatprep.subr.mxu0 0.0
  %432 = vmatpush1.xpose.msra.mxu0 0.0
  %433 = vmatprep.subr.mxu0 0.0
  %434 = vmatpush1.xpose.msra.mxu0 0.0
  %435 = vmatprep.subr.mxu0 0.0
  %436 = vmatpush1.xpose.msra.mxu0 0.0
  %437 = vmatprep.subr.mxu0 0.0
  %438 = vmatpush1.xpose.msra.mxu0 0.0
  %439 = vmatprep.subr.mxu0 0.0
  %440 = vmatpush1.xpose.msra.mxu0 0.0
  %441 = vmatprep.subr.mxu0 0.0
  %442 = vmatpush1.xpose.msra.mxu0 0.0
  %443 = vmatprep.subr.mxu0 0.0
  %444 = vmatpush1.xpose.msra.mxu0 0.0
  %445 = vmatprep.subr.mxu0 0.0
  %446 = vmatpush1.xpose.msra.mxu0 0.0
  %447 = vmatprep.subr.mxu0 0.0
  %448 = vmatpush1.xpose.msra.mxu0 0.0
  %449 = vmatprep.subr.mxu0 0.0
  %450 = vmatpush1.xpose.msra.mxu0 0.0
  %451 = vmatprep.subr.mxu0 0.0
  %452 = vmatpush1.xpose.msra.mxu0 0.0
  %453 = vmatprep.subr.mxu0 0.0
  %454 = vmatpush1.xpose.msra.mxu0 0.0
  %455 = vmatprep.subr.mxu0 0.0
  %456 = vmatpush1.xpose.msra.mxu0 0.0
  %457 = vmatprep.subr.mxu0 0.0
  %458 = vmatpush1.xpose.msra.mxu0 %v427
  %459 = vmatprep.subr.mxu0 0.0
  %460 = vmatpush1.xpose.msra.mxu0 %v425
  %461 = vmatprep.subr.mxu0 0.0
  %462 = vmatpush2.xpose.msra.mxu0 0.0
  %463 = vmatprep.subr.mxu0 0.0
  %464 = vmatpush2.xpose.msra.mxu0 0.0
  %465 = vmatprep.subr.mxu0 0.0
  %466 = vmatpush2.xpose.msra.mxu0 0.0
  %467 = vmatprep.subr.mxu0 0.0
  %468 = vmatpush2.xpose.msra.mxu0 0.0
  %469 = vmatprep.subr.mxu0 0.0
  %470 = vmatpush2.xpose.msra.mxu0 0.0
  %471 = vmatprep.subr.mxu0 0.0
  %472 = vmatpush2.xpose.msra.mxu0 0.0
  %473 = vmatprep.subr.mxu0 0.0
  %474 = vmatpush2.xpose.msra.mxu0 0.0
  %475 = vmatprep.subr.mxu0 0.0
  %476 = vmatpush2.xpose.msra.mxu0 0.0
  %477 = vmatprep.subr.mxu0 0.0
  %478 = vmatpush2.xpose.msra.mxu0 0.0
  %479 = vmatprep.subr.mxu0 0.0
  %480 = vmatpush2.xpose.msra.mxu0 0.0
  %481 = vmatprep.subr.mxu0 0.0
  %482 = vmatpush2.xpose.msra.mxu0 0.0
  %483 = vmatprep.subr.mxu0 0.0
  %484 = vmatpush2.xpose.msra.mxu0 0.0
  %485 = vmatprep.subr.mxu0 0.0
  %486 = vmatpush2.xpose.msra.mxu0 0.0
  %487 = vmatprep.subr.mxu0 0.0
  %488 = vmatpush2.xpose.msra.mxu0 0.0
  %489 = vmatprep.subr.mxu0 0.0
  %490 = vmatpush2.xpose.msra.mxu0 0.0
  %491 = vmatprep.subr.mxu0 0.0
  %492 = vmatpush2.xpose.msra.mxu0 0.0
  %493 = vmatprep.mubr.f32.mxu0 0.0
  %494 = vmatmul.mubr.f32.gmra.mxu0 %v421
  %v495 = vpop.f32.mrf.mxu0
  %v496 = vadd.f32 0.0, %v495
  %v497 = vpop.f32.mrf.mxu0
  %498 = vmatprep.mubr.f32.mxu0 0.0
  %499 = vmatmul.mubr.f32.gmra.mxu0 %v423
  %v500 = vpop.f32.mrf.mxu0
  %v501 = vadd.f32 0.0, %v500
  %v502 = vpop.f32.mrf.mxu0
  %503 = vdwg.mxu0
  %504 = vrot.lane.b32.xlu0 %v235, 96
  %v505 = vpop.permute.xlu0 %504
  %506 = vrot.lane.b32.xlu0 %v237, 96
  %v507 = vpop.permute.xlu0 %506
  %v508 = vsel %vm246, %v235, 0
  %v510 = vsel %vm246, %v237, 0
  %v512 = vsel %vm246, %v505, 0
  %v514 = vsel %vm246, %v507, 0
  %516 = vmatprep.subr.mxu0 0.0
  %517 = vmatpush1.xpose.msra.mxu0 0.0
  %518 = vmatprep.subr.mxu0 0.0
  %519 = vmatpush1.xpose.msra.mxu0 0.0
  %520 = vmatprep.subr.mxu0 0.0
  %521 = vmatpush1.xpose.msra.mxu0 0.0
  %522 = vmatprep.subr.mxu0 0.0
  %523 = vmatpush1.xpose.msra.mxu0 0.0
  %524 = vmatprep.subr.mxu0 0.0
  %525 = vmatpush1.xpose.msra.mxu0 0.0
  %526 = vmatprep.subr.mxu0 0.0
  %527 = vmatpush1.xpose.msra.mxu0 0.0
  %528 = vmatprep.subr.mxu0 0.0
  %529 = vmatpush1.xpose.msra.mxu0 0.0
  %530 = vmatprep.subr.mxu0 0.0
  %531 = vmatpush1.xpose.msra.mxu0 0.0
  %532 = vmatprep.subr.mxu0 0.0
  %533 = vmatpush1.xpose.msra.mxu0 0.0
  %534 = vmatprep.subr.mxu0 0.0
  %535 = vmatpush1.xpose.msra.mxu0 0.0
  %536 = vmatprep.subr.mxu0 0.0
  %537 = vmatpush1.xpose.msra.mxu0 0.0
  %538 = vmatprep.subr.mxu0 0.0
  %539 = vmatpush1.xpose.msra.mxu0 0.0
  %540 = vmatprep.subr.mxu0 0.0
  %541 = vmatpush1.xpose.msra.mxu0 0.0
  %542 = vmatprep.subr.mxu0 0.0
  %543 = vmatpush1.xpose.msra.mxu0 0.0
  %544 = vmatprep.subr.mxu0 0.0
  %545 = vmatpush1.xpose.msra.mxu0 %v514
  %546 = vmatprep.subr.mxu0 0.0
  %547 = vmatpush1.xpose.msra.mxu0 %v512
  %548 = vmatprep.subr.mxu0 0.0
  %549 = vmatpush2.xpose.msra.mxu0 0.0
  %550 = vmatprep.subr.mxu0 0.0
  %551 = vmatpush2.xpose.msra.mxu0 0.0
  %552 = vmatprep.subr.mxu0 0.0
  %553 = vmatpush2.xpose.msra.mxu0 0.0
  %554 = vmatprep.subr.mxu0 0.0
  %555 = vmatpush2.xpose.msra.mxu0 0.0
  %556 = vmatprep.subr.mxu0 0.0
  %557 = vmatpush2.xpose.msra.mxu0 0.0
  %558 = vmatprep.subr.mxu0 0.0
  %559 = vmatpush2.xpose.msra.mxu0 0.0
  %560 = vmatprep.subr.mxu0 0.0
  %561 = vmatpush2.xpose.msra.mxu0 0.0
  %562 = vmatprep.subr.mxu0 0.0
  %563 = vmatpush2.xpose.msra.mxu0 0.0
  %564 = vmatprep.subr.mxu0 0.0
  %565 = vmatpush2.xpose.msra.mxu0 0.0
  %566 = vmatprep.subr.mxu0 0.0
  %567 = vmatpush2.xpose.msra.mxu0 0.0
  %568 = vmatprep.subr.mxu0 0.0
  %569 = vmatpush2.xpose.msra.mxu0 0.0
  %570 = vmatprep.subr.mxu0 0.0
  %571 = vmatpush2.xpose.msra.mxu0 0.0
  %572 = vmatprep.subr.mxu0 0.0
  %573 = vmatpush2.xpose.msra.mxu0 0.0
  %574 = vmatprep.subr.mxu0 0.0
  %575 = vmatpush2.xpose.msra.mxu0 0.0
  %576 = vmatprep.subr.mxu0 0.0
  %577 = vmatpush2.xpose.msra.mxu0 0.0
  %578 = vmatprep.subr.mxu0 0.0
  %579 = vmatpush2.xpose.msra.mxu0 0.0
  %580 = vmatprep.mubr.f32.mxu0 0.0
  %581 = vmatmul.mubr.f32.gmra.mxu0 %v508
  %v582 = vpop.f32.mrf.mxu0
  %v583 = vadd.f32 0.0, %v582
  %v584 = vpop.f32.mrf.mxu0
  %585 = vmatprep.mubr.f32.mxu0 0.0
  %586 = vmatmul.mubr.f32.gmra.mxu0 %v510
  %v587 = vpop.f32.mrf.mxu0
  %v588 = vadd.f32 0.0, %v587
  %v589 = vpop.f32.mrf.mxu0
  %590 = vdwg.mxu0
  %591 = vrot.lane.b32.xlu0 %v206, 96
  %v592 = vpop.permute.xlu0 %591
  %593 = vrot.lane.b32.xlu0 %v211, 96
  %v594 = vpop.permute.xlu0 %593
  %v595 = vsel %vm246, %v206, 0
  %v597 = vsel %vm246, %v211, 0
  %v599 = vsel %vm246, %v592, 0
  %v601 = vsel %vm246, %v594, 0
  %603 = vmatprep.subr.mxu0 0.0
  %604 = vmatpush1.xpose.msra.mxu0 0.0
  %605 = vmatprep.subr.mxu0 0.0
  %606 = vmatpush1.xpose.msra.mxu0 0.0
  %607 = vmatprep.subr.mxu0 0.0
  %608 = vmatpush1.xpose.msra.mxu0 0.0
  %609 = vmatprep.subr.mxu0 0.0
  %610 = vmatpush1.xpose.msra.mxu0 0.0
  %611 = vmatprep.subr.mxu0 0.0
  %612 = vmatpush1.xpose.msra.mxu0 0.0
  %613 = vmatprep.subr.mxu0 0.0
  %614 = vmatpush1.xpose.msra.mxu0 0.0
  %615 = vmatprep.subr.mxu0 0.0
  %616 = vmatpush1.xpose.msra.mxu0 0.0
  %617 = vmatprep.subr.mxu0 0.0
  %618 = vmatpush1.xpose.msra.mxu0 0.0
  %619 = vmatprep.subr.mxu0 0.0
  %620 = vmatpush1.xpose.msra.mxu0 0.0
  %621 = vmatprep.subr.mxu0 0.0
  %622 = vmatpush1.xpose.msra.mxu0 0.0
  %623 = vmatprep.subr.mxu0 0.0
  %624 = vmatpush1.xpose.msra.mxu0 0.0
  %625 = vmatprep.subr.mxu0 0.0
  %626 = vmatpush1.xpose.msra.mxu0 0.0
  %627 = vmatprep.subr.mxu0 0.0
  %628 = vmatpush1.xpose.msra.mxu0 0.0
  %629 = vmatprep.subr.mxu0 0.0
  %630 = vmatpush1.xpose.msra.mxu0 0.0
  %631 = vmatprep.subr.mxu0 0.0
  %632 = vmatpush1.xpose.msra.mxu0 %v601
  %633 = vmatprep.subr.mxu0 0.0
  %634 = vmatpush1.xpose.msra.mxu0 %v599
  %635 = vmatprep.subr.mxu0 0.0
  %636 = vmatpush2.xpose.msra.mxu0 0.0
  %637 = vmatprep.subr.mxu0 0.0
  %638 = vmatpush2.xpose.msra.mxu0 0.0
  %639 = vmatprep.subr.mxu0 0.0
  %640 = vmatpush2.xpose.msra.mxu0 0.0
  %641 = vmatprep.subr.mxu0 0.0
  %642 = vmatpush2.xpose.msra.mxu0 0.0
  %643 = vmatprep.subr.mxu0 0.0
  %644 = vmatpush2.xpose.msra.mxu0 0.0
  %645 = vmatprep.subr.mxu0 0.0
  %646 = vmatpush2.xpose.msra.mxu0 0.0
  %647 = vmatprep.subr.mxu0 0.0
  %648 = vmatpush2.xpose.msra.mxu0 0.0
  %649 = vmatprep.subr.mxu0 0.0
  %650 = vmatpush2.xpose.msra.mxu0 0.0
  %651 = vmatprep.subr.mxu0 0.0
  %652 = vmatpush2.xpose.msra.mxu0 0.0
  %653 = vmatprep.subr.mxu0 0.0
  %654 = vmatpush2.xpose.msra.mxu0 0.0
  %655 = vmatprep.subr.mxu0 0.0
  %656 = vmatpush2.xpose.msra.mxu0 0.0
  %657 = vmatprep.subr.mxu0 0.0
  %658 = vmatpush2.xpose.msra.mxu0 0.0
  %659 = vmatprep.subr.mxu0 0.0
  %660 = vmatpush2.xpose.msra.mxu0 0.0
  %661 = vmatprep.subr.mxu0 0.0
  %662 = vmatpush2.xpose.msra.mxu0 0.0
  %663 = vmatprep.subr.mxu0 0.0
  %664 = vmatpush2.xpose.msra.mxu0 0.0
  %665 = vmatprep.subr.mxu0 0.0
  %666 = vmatpush2.xpose.msra.mxu0 0.0
  %667 = vmatprep.mubr.f32.mxu0 0.0
  %668 = vmatmul.mubr.f32.gmra.mxu0 %v595
  %v669 = vpop.f32.mrf.mxu0
  %v670 = vadd.f32 0.0, %v669
  %v671 = vpop.f32.mrf.mxu0
  %672 = vmatprep.mubr.f32.mxu0 0.0
  %673 = vmatmul.mubr.f32.gmra.mxu0 %v597
  %v674 = vpop.f32.mrf.mxu0
  %v675 = vadd.f32 0.0, %v674
  %v676 = vpop.f32.mrf.mxu0
  %677 = vdwg.mxu0
  %678 = vrot.lane.b32.xlu0 %v223, 96
  %v679 = vpop.permute.xlu0 %678
  %680 = vrot.lane.b32.xlu0 %v225, 96
  %v681 = vpop.permute.xlu0 %680
  %v682 = vsel %vm246, %v223, 0
  %v684 = vsel %vm246, %v225, 0
  %v686 = vsel %vm246, %v679, 0
  %v688 = vsel %vm246, %v681, 0
  %690 = vmatprep.subr.mxu0 0.0
  %691 = vmatpush1.xpose.msra.mxu0 0.0
  %692 = vmatprep.subr.mxu0 0.0
  %693 = vmatpush1.xpose.msra.mxu0 0.0
  %694 = vmatprep.subr.mxu0 0.0
  %695 = vmatpush1.xpose.msra.mxu0 0.0
  %696 = vmatprep.subr.mxu0 0.0
  %697 = vmatpush1.xpose.msra.mxu0 0.0
  %698 = vmatprep.subr.mxu0 0.0
  %699 = vmatpush1.xpose.msra.mxu0 0.0
  %700 = vmatprep.subr.mxu0 0.0
  %701 = vmatpush1.xpose.msra.mxu0 0.0
  %702 = vmatprep.subr.mxu0 0.0
  %703 = vmatpush1.xpose.msra.mxu0 0.0
  %704 = vmatprep.subr.mxu0 0.0
  %705 = vmatpush1.xpose.msra.mxu0 0.0
  %706 = vmatprep.subr.mxu0 0.0
  %707 = vmatpush1.xpose.msra.mxu0 0.0
  %708 = vmatprep.subr.mxu0 0.0
  %709 = vmatpush1.xpose.msra.mxu0 0.0
  %710 = vmatprep.subr.mxu0 0.0
  %711 = vmatpush1.xpose.msra.mxu0 0.0
  %712 = vmatprep.subr.mxu0 0.0
  %713 = vmatpush1.xpose.msra.mxu0 0.0
  %714 = vmatprep.subr.mxu0 0.0
  %715 = vmatpush1.xpose.msra.mxu0 0.0
  %716 = vmatprep.subr.mxu0 0.0
  %717 = vmatpush1.xpose.msra.mxu0 0.0
  %718 = vmatprep.subr.mxu0 0.0
  %719 = vmatpush1.xpose.msra.mxu0 %v688
  %720 = vmatprep.subr.mxu0 0.0
  %721 = vmatpush1.xpose.msra.mxu0 %v686
  %722 = vmatprep.subr.mxu0 0.0
  %723 = vmatpush2.xpose.msra.mxu0 0.0
  %724 = vmatprep.subr.mxu0 0.0
  %725 = vmatpush2.xpose.msra.mxu0 0.0
  %726 = vmatprep.subr.mxu0 0.0
  %727 = vmatpush2.xpose.msra.mxu0 0.0
  %728 = vmatprep.subr.mxu0 0.0
  %729 = vmatpush2.xpose.msra.mxu0 0.0
  %730 = vmatprep.subr.mxu0 0.0
  %731 = vmatpush2.xpose.msra.mxu0 0.0
  %732 = vmatprep.subr.mxu0 0.0
  %733 = vmatpush2.xpose.msra.mxu0 0.0
  %734 = vmatprep.subr.mxu0 0.0
  %735 = vmatpush2.xpose.msra.mxu0 0.0
  %736 = vmatprep.subr.mxu0 0.0
  %737 = vmatpush2.xpose.msra.mxu0 0.0
  %738 = vmatprep.subr.mxu0 0.0
  %739 = vmatpush2.xpose.msra.mxu0 0.0
  %740 = vmatprep.subr.mxu0 0.0
  %741 = vmatpush2.xpose.msra.mxu0 0.0
  %742 = vmatprep.subr.mxu0 0.0
  %743 = vmatpush2.xpose.msra.mxu0 0.0
  %744 = vmatprep.subr.mxu0 0.0
  %745 = vmatpush2.xpose.msra.mxu0 0.0
  %746 = vmatprep.subr.mxu0 0.0
  %747 = vmatpush2.xpose.msra.mxu0 0.0
  %748 = vmatprep.subr.mxu0 0.0
  %749 = vmatpush2.xpose.msra.mxu0 0.0
  %750 = vmatprep.subr.mxu0 0.0
  %751 = vmatpush2.xpose.msra.mxu0 0.0
  %752 = vmatprep.subr.mxu0 0.0
  %753 = vmatpush2.xpose.msra.mxu0 0.0
  %754 = vmatprep.mubr.f32.mxu0 0.0
  %755 = vmatmul.mubr.f32.gmra.mxu0 %v682
  %v756 = vpop.f32.mrf.mxu0
  %v757 = vadd.f32 0.0, %v756
  %v758 = vpop.f32.mrf.mxu0
  %759 = vmatprep.mubr.f32.mxu0 0.0
  %760 = vmatmul.mubr.f32.gmra.mxu0 %v684
  %v761 = vpop.f32.mrf.mxu0
  %v762 = vadd.f32 0.0, %v761
  %v763 = vpop.f32.mrf.mxu0
  %764 = vdwg.mxu0
  %765 = vrot.lane.b32.xlu0 %v231, 96
  %v766 = vpop.permute.xlu0 %765
  %767 = vrot.lane.b32.xlu0 %v233, 96
  %v768 = vpop.permute.xlu0 %767
  %v769 = vsel %vm246, %v231, 0
  %v771 = vsel %vm246, %v233, 0
  %v773 = vsel %vm246, %v766, 0
  %v775 = vsel %vm246, %v768, 0
  %777 = vmatprep.subr.mxu0 0.0
  %778 = vmatpush1.xpose.msra.mxu0 0.0
  %779 = vmatprep.subr.mxu0 0.0
  %780 = vmatpush1.xpose.msra.mxu0 0.0
  %781 = vmatprep.subr.mxu0 0.0
  %782 = vmatpush1.xpose.msra.mxu0 0.0
  %783 = vmatprep.subr.mxu0 0.0
  %784 = vmatpush1.xpose.msra.mxu0 0.0
  %785 = vmatprep.subr.mxu0 0.0
  %786 = vmatpush1.xpose.msra.mxu0 0.0
  %787 = vmatprep.subr.mxu0 0.0
  %788 = vmatpush1.xpose.msra.mxu0 0.0
  %789 = vmatprep.subr.mxu0 0.0
  %790 = vmatpush1.xpose.msra.mxu0 0.0
  %791 = vmatprep.subr.mxu0 0.0
  %792 = vmatpush1.xpose.msra.mxu0 0.0
  %793 = vmatprep.subr.mxu0 0.0
  %794 = vmatpush1.xpose.msra.mxu0 0.0
  %795 = vmatprep.subr.mxu0 0.0
  %796 = vmatpush1.xpose.msra.mxu0 0.0
  %797 = vmatprep.subr.mxu0 0.0
  %798 = vmatpush1.xpose.msra.mxu0 0.0
  %799 = vmatprep.subr.mxu0 0.0
  %800 = vmatpush1.xpose.msra.mxu0 0.0
  %801 = vmatprep.subr.mxu0 0.0
  %802 = vmatpush1.xpose.msra.mxu0 0.0
  %803 = vmatprep.subr.mxu0 0.0
  %804 = vmatpush1.xpose.msra.mxu0 0.0
  %805 = vmatprep.subr.mxu0 0.0
  %806 = vmatpush1.xpose.msra.mxu0 %v775
  %807 = vmatprep.subr.mxu0 0.0
  %808 = vmatpush1.xpose.msra.mxu0 %v773
  %809 = vmatprep.subr.mxu0 0.0
  %810 = vmatpush2.xpose.msra.mxu0 0.0
  %811 = vmatprep.subr.mxu0 0.0
  %812 = vmatpush2.xpose.msra.mxu0 0.0
  %813 = vmatprep.subr.mxu0 0.0
  %814 = vmatpush2.xpose.msra.mxu0 0.0
  %815 = vmatprep.subr.mxu0 0.0
  %816 = vmatpush2.xpose.msra.mxu0 0.0
  %817 = vmatprep.subr.mxu0 0.0
  %818 = vmatpush2.xpose.msra.mxu0 0.0
  %819 = vmatprep.subr.mxu0 0.0
  %820 = vmatpush2.xpose.msra.mxu0 0.0
  %821 = vmatprep.subr.mxu0 0.0
  %822 = vmatpush2.xpose.msra.mxu0 0.0
  %823 = vmatprep.subr.mxu0 0.0
  %824 = vmatpush2.xpose.msra.mxu0 0.0
  %825 = vmatprep.subr.mxu0 0.0
  %826 = vmatpush2.xpose.msra.mxu0 0.0
  %827 = vmatprep.subr.mxu0 0.0
  %828 = vmatpush2.xpose.msra.mxu0 0.0
  %829 = vmatprep.subr.mxu0 0.0
  %830 = vmatpush2.xpose.msra.mxu0 0.0
  %831 = vmatprep.subr.mxu0 0.0
  %832 = vmatpush2.xpose.msra.mxu0 0.0
  %833 = vmatprep.subr.mxu0 0.0
  %834 = vmatpush2.xpose.msra.mxu0 0.0
  %835 = vmatprep.subr.mxu0 0.0
  %836 = vmatpush2.xpose.msra.mxu0 0.0
  %837 = vmatprep.subr.mxu0 0.0
  %838 = vmatpush2.xpose.msra.mxu0 0.0
  %839 = vmatprep.subr.mxu0 0.0
  %840 = vmatpush2.xpose.msra.mxu0 0.0
  %841 = vmatprep.mubr.f32.mxu0 0.0
  %842 = vmatmul.mubr.f32.gmra.mxu0 %v769
  %v843 = vpop.f32.mrf.mxu0
  %v844 = vadd.f32 0.0, %v843
  %v845 = vpop.f32.mrf.mxu0
  %846 = vmatprep.mubr.f32.mxu0 0.0
  %847 = vmatmul.mubr.f32.gmra.mxu0 %v771
  %v848 = vpop.f32.mrf.mxu0
  %v849 = vadd.f32 0.0, %v848
  %v850 = vpop.f32.mrf.mxu0
  %851 = vdwg.mxu0
  %852 = vrot.lane.b32.xlu0 %v239, 96
  %v853 = vpop.permute.xlu0 %852
  %854 = vrot.lane.b32.xlu0 %v241, 96
  %v855 = vpop.permute.xlu0 %854
  %v856 = vsel %vm246, %v239, 0
  %v858 = vsel %vm246, %v241, 0
  %v860 = vsel %vm246, %v853, 0
  %v862 = vsel %vm246, %v855, 0
  %864 = vmatprep.subr.mxu0 0.0
  %865 = vmatpush1.xpose.msra.mxu0 0.0
  %866 = vmatprep.subr.mxu0 0.0
  %867 = vmatpush1.xpose.msra.mxu0 0.0
  %868 = vmatprep.subr.mxu0 0.0
  %869 = vmatpush1.xpose.msra.mxu0 0.0
  %870 = vmatprep.subr.mxu0 0.0
  %871 = vmatpush1.xpose.msra.mxu0 0.0
  %872 = vmatprep.subr.mxu0 0.0
  %873 = vmatpush1.xpose.msra.mxu0 0.0
  %874 = vmatprep.subr.mxu0 0.0
  %875 = vmatpush1.xpose.msra.mxu0 0.0
  %876 = vmatprep.subr.mxu0 0.0
  %877 = vmatpush1.xpose.msra.mxu0 0.0
  %878 = vmatprep.subr.mxu0 0.0
  %879 = vmatpush1.xpose.msra.mxu0 0.0
  %880 = vmatprep.subr.mxu0 0.0
  %881 = vmatpush1.xpose.msra.mxu0 0.0
  %882 = vmatprep.subr.mxu0 0.0
  %883 = vmatpush1.xpose.msra.mxu0 0.0
  %884 = vmatprep.subr.mxu0 0.0
  %885 = vmatpush1.xpose.msra.mxu0 0.0
  %886 = vmatprep.subr.mxu0 0.0
  %887 = vmatpush1.xpose.msra.mxu0 0.0
  %888 = vmatprep.subr.mxu0 0.0
  %889 = vmatpush1.xpose.msra.mxu0 0.0
  %890 = vmatprep.subr.mxu0 0.0
  %891 = vmatpush1.xpose.msra.mxu0 0.0
  %892 = vmatprep.subr.mxu0 0.0
  %893 = vmatpush1.xpose.msra.mxu0 %v862
  %894 = vmatprep.subr.mxu0 0.0
  %895 = vmatpush1.xpose.msra.mxu0 %v860
  %896 = vmatprep.subr.mxu0 0.0
  %897 = vmatpush2.xpose.msra.mxu0 0.0
  %898 = vmatprep.subr.mxu0 0.0
  %899 = vmatpush2.xpose.msra.mxu0 0.0
  %900 = vmatprep.subr.mxu0 0.0
  %901 = vmatpush2.xpose.msra.mxu0 0.0
  %902 = vmatprep.subr.mxu0 0.0
  %903 = vmatpush2.xpose.msra.mxu0 0.0
  %904 = vmatprep.subr.mxu0 0.0
  %905 = vmatpush2.xpose.msra.mxu0 0.0
  %906 = vmatprep.subr.mxu0 0.0
  %907 = vmatpush2.xpose.msra.mxu0 0.0
  %908 = vmatprep.subr.mxu0 0.0
  %909 = vmatpush2.xpose.msra.mxu0 0.0
  %910 = vmatprep.subr.mxu0 0.0
  %911 = vmatpush2.xpose.msra.mxu0 0.0
  %912 = vmatprep.subr.mxu0 0.0
  %913 = vmatpush2.xpose.msra.mxu0 0.0
  %914 = vmatprep.subr.mxu0 0.0
  %915 = vmatpush2.xpose.msra.mxu0 0.0
  %916 = vmatprep.subr.mxu0 0.0
  %917 = vmatpush2.xpose.msra.mxu0 0.0
  %918 = vmatprep.subr.mxu0 0.0
  %919 = vmatpush2.xpose.msra.mxu0 0.0
  %920 = vmatprep.subr.mxu0 0.0
  %921 = vmatpush2.xpose.msra.mxu0 0.0
  %922 = vmatprep.subr.mxu0 0.0
  %923 = vmatpush2.xpose.msra.mxu0 0.0
  %924 = vmatprep.subr.mxu0 0.0
  %925 = vmatpush2.xpose.msra.mxu0 0.0
  %926 = vmatprep.subr.mxu0 0.0
  %927 = vmatpush2.xpose.msra.mxu0 0.0
  %928 = vmatprep.mubr.f32.mxu0 0.0
  %929 = vmatmul.mubr.f32.gmra.mxu0 %v856
  %v930 = vpop.f32.mrf.mxu0
  %v931 = vadd.f32 0.0, %v930
  %v932 = vpop.f32.mrf.mxu0
  %933 = vmatprep.mubr.f32.mxu0 0.0
  %934 = vmatmul.mubr.f32.gmra.mxu0 %v858
  %v935 = vpop.f32.mrf.mxu0
  %v936 = vadd.f32 0.0, %v935
  %v937 = vpop.f32.mrf.mxu0
  %938 = vdwg.mxu0
  %s939 = smul.u32 0, 2
  %v940 = vlaneseq
  %v941 = vshrl.u32 %v940, 7
  %v942 = vadd.s32 %v941, 8
  %v943 = vlaneseq
  %v944 = vand.u32 %v943, 127
  %s945 = sld [smem:[#allocation3 + %s939]]
  %v946 = vstv %s945
  %vm947 = vcmp.lt.s32.totalorder %v941, %v946
  %vm948 = vcmp.lt.s32.totalorder %v942, %v946
  %vm949 = vcmp.lt.s32.totalorder %v944, %v946
  %vm950 = vmand %vm947, %vm949
  %vm951 = vmand %vm948, %vm949
  %s952 = sadd.s32 %s939, 1
  %s953 = sld [smem:[#allocation3 + %s952]]
  %v954 = vstv %s953
  %vm955 = vcmp.lt.s32.totalorder %v941, %v954
  %vm956 = vcmp.lt.s32.totalorder %v942, %v954
  %vm957 = vcmp.lt.s32.totalorder %v944, %v954
  %vm958 = vmand %vm955, %vm957
  %vm959 = vmand %vm956, %vm957
  %v960 = vsel %vm950, 1, 0
  %v961 = vsel %vm951, 1, 0
  %v962 = vsel %vm958, 1, 0
  %v963 = vsel %vm959, 1, 0
  %vm964 = vcmp.eq.s32.totalorder %v960, 1
  %vm965 = vcmp.eq.s32.totalorder %v961, 1
  %vm966 = vcmp.eq.s32.totalorder %v962, 1
  %vm967 = vcmp.eq.s32.totalorder %v963, 1
  %v968 = vsel %vm964, %v322, -10000.0
  %v969 = vsel %vm965, %v327, -10000.0
  %v970 = vsel %vm964, %v409, -10000.0
  %v971 = vsel %vm965, %v414, -10000.0
  %v972 = vsel %vm964, %v496, -10000.0
  %v973 = vsel %vm965, %v501, -10000.0
  %v974 = vsel %vm964, %v583, -10000.0
  %v975 = vsel %vm965, %v588, -10000.0
  %v976 = vsel %vm966, %v670, -10000.0
  %v977 = vsel %vm967, %v675, -10000.0
  %v978 = vsel %vm966, %v757, -10000.0
  %v979 = vsel %vm967, %v762, -10000.0
  %v980 = vsel %vm966, %v844, -10000.0
  %v981 = vsel %vm967, %v849, -10000.0
  %v982 = vsel %vm966, %v931, -10000.0
  %v983 = vsel %vm967, %v936, -10000.0
  %vm984 = vcmask 130048
  %v985 = vsel %vm984, %v968, -inf
  %986 = vmax.xlane.f32.xlu0 %v985
  %v987 = vpop.xlane.xlu0 %986
  %v988 = vsel %vm984, %v969, -inf
  %989 = vmax.xlane.f32.xlu0 %v988
  %v990 = vpop.xlane.xlu0 %989
  %v991 = vsel %vm984, %v970, -inf
  %992 = vmax.xlane.f32.xlu0 %v991
  %v993 = vpop.xlane.xlu0 %992
  %v994 = vsel %vm984, %v971, -inf
  %995 = vmax.xlane.f32.xlu0 %v994
  %v996 = vpop.xlane.xlu0 %995
  %v997 = vsel %vm984, %v972, -inf
  %998 = vmax.xlane.f32.xlu0 %v997
  %v999 = vpop.xlane.xlu0 %998
  %v1000 = vsel %vm984, %v973, -inf
  %1001 = vmax.xlane.f32.xlu0 %v1000
  %v1002 = vpop.xlane.xlu0 %1001
  %v1003 = vsel %vm984, %v974, -inf
  %1004 = vmax.xlane.f32.xlu0 %v1003
  %v1005 = vpop.xlane.xlu0 %1004
  %v1006 = vsel %vm984, %v975, -inf
  %1007 = vmax.xlane.f32.xlu0 %v1006
  %v1008 = vpop.xlane.xlu0 %1007
  %v1009 = vsel %vm984, %v976, -inf
  %1010 = vmax.xlane.f32.xlu0 %v1009
  %v1011 = vpop.xlane.xlu0 %1010
  %v1012 = vsel %vm984, %v977, -inf
  %1013 = vmax.xlane.f32.xlu0 %v1012
  %v1014 = vpop.xlane.xlu0 %1013
  %v1015 = vsel %vm984, %v978, -inf
  %1016 = vmax.xlane.f32.xlu0 %v1015
  %v1017 = vpop.xlane.xlu0 %1016
  %v1018 = vsel %vm984, %v979, -inf
  %1019 = vmax.xlane.f32.xlu0 %v1018
  %v1020 = vpop.xlane.xlu0 %1019
  %v1021 = vsel %vm984, %v980, -inf
  %1022 = vmax.xlane.f32.xlu0 %v1021
  %v1023 = vpop.xlane.xlu0 %1022
  %v1024 = vsel %vm984, %v981, -inf
  %1025 = vmax.xlane.f32.xlu0 %v1024
  %v1026 = vpop.xlane.xlu0 %1025
  %v1027 = vsel %vm984, %v982, -inf
  %1028 = vmax.xlane.f32.xlu0 %v1027
  %v1029 = vpop.xlane.xlu0 %1028
  %v1030 = vsel %vm984, %v983, -inf
  %1031 = vmax.xlane.f32.xlu0 %v1030
  %v1032 = vpop.xlane.xlu0 %1031
  %v1033 = vsub.f32 %v968, %v987
  %v1034 = vsub.f32 %v969, %v990
  %v1035 = vsub.f32 %v970, %v993
  %v1036 = vsub.f32 %v971, %v996
  %v1037 = vsub.f32 %v972, %v999
  %v1038 = vsub.f32 %v973, %v1002
  %v1039 = vsub.f32 %v974, %v1005
  %v1040 = vsub.f32 %v975, %v1008
  %v1041 = vsub.f32 %v976, %v1011
  %v1042 = vsub.f32 %v977, %v1014
  %v1043 = vsub.f32 %v978, %v1017
  %v1044 = vsub.f32 %v979, %v1020
  %v1045 = vsub.f32 %v980, %v1023
  %v1046 = vsub.f32 %v981, %v1026
  %v1047 = vsub.f32 %v982, %v1029
  %v1048 = vsub.f32 %v983, %v1032
  %v1049 = vmul.f32 %v1033, 1.442695
  %v1050 = vpow.pop %v1049
  %v1051 = vmul.f32 %v1034, 1.442695
  %v1052 = vpow.pop %v1051
  %v1053 = vmul.f32 %v1035, 1.442695
  %v1054 = vpow.pop %v1053
  %v1055 = vmul.f32 %v1036, 1.442695
  %v1056 = vpow.pop %v1055
  %v1057 = vmul.f32 %v1037, 1.442695
  %v1058 = vpow.pop %v1057
  %v1059 = vmul.f32 %v1038, 1.442695
  %v1060 = vpow.pop %v1059
  %v1061 = vmul.f32 %v1039, 1.442695
  %v1062 = vpow.pop %v1061
  %v1063 = vmul.f32 %v1040, 1.442695
  %v1064 = vpow.pop %v1063
  %v1065 = vmul.f32 %v1041, 1.442695
  %v1066 = vpow.pop %v1065
  %v1067 = vmul.f32 %v1042, 1.442695
  %v1068 = vpow.pop %v1067
  %v1069 = vmul.f32 %v1043, 1.442695
  %v1070 = vpow.pop %v1069
  %v1071 = vmul.f32 %v1044, 1.442695
  %v1072 = vpow.pop %v1071
  %v1073 = vmul.f32 %v1045, 1.442695
  %v1074 = vpow.pop %v1073
  %v1075 = vmul.f32 %v1046, 1.442695
  %v1076 = vpow.pop %v1075
  %v1077 = vmul.f32 %v1047, 1.442695
  %v1078 = vpow.pop %v1077
  %v1079 = vmul.f32 %v1048, 1.442695
  %v1080 = vpow.pop %v1079
  %v1081 = vsel %vm984, %v1050, 0.0
  %1082 = vadd.xlane.f32.xlu0 %v1081
  %v1083 = vpop.xlane.xlu0 %1082
  %v1084 = vsel %vm984, %v1052, 0.0
  %1085 = vadd.xlane.f32.xlu0 %v1084
  %v1086 = vpop.xlane.xlu0 %1085
  %v1087 = vsel %vm984, %v1054, 0.0
  %1088 = vadd.xlane.f32.xlu0 %v1087
  %v1089 = vpop.xlane.xlu0 %1088
  %v1090 = vsel %vm984, %v1056, 0.0
  %1091 = vadd.xlane.f32.xlu0 %v1090
  %v1092 = vpop.xlane.xlu0 %1091
  %v1093 = vsel %vm984, %v1058, 0.0
  %1094 = vadd.xlane.f32.xlu0 %v1093
  %v1095 = vpop.xlane.xlu0 %1094
  %v1096 = vsel %vm984, %v1060, 0.0
  %1097 = vadd.xlane.f32.xlu0 %v1096
  %v1098 = vpop.xlane.xlu0 %1097
  %v1099 = vsel %vm984, %v1062, 0.0
  %1100 = vadd.xlane.f32.xlu0 %v1099
  %v1101 = vpop.xlane.xlu0 %1100
  %v1102 = vsel %vm984, %v1064, 0.0
  %1103 = vadd.xlane.f32.xlu0 %v1102
  %v1104 = vpop.xlane.xlu0 %1103
  %v1105 = vsel %vm984, %v1066, 0.0
  %1106 = vadd.xlane.f32.xlu0 %v1105
  %v1107 = vpop.xlane.xlu0 %1106
  %v1108 = vsel %vm984, %v1068, 0.0
  %1109 = vadd.xlane.f32.xlu0 %v1108
  %v1110 = vpop.xlane.xlu0 %1109
  %v1111 = vsel %vm984, %v1070, 0.0
  %1112 = vadd.xlane.f32.xlu0 %v1111
  %v1113 = vpop.xlane.xlu0 %1112
  %v1114 = vsel %vm984, %v1072, 0.0
  %1115 = vadd.xlane.f32.xlu0 %v1114
  %v1116 = vpop.xlane.xlu0 %1115
  %v1117 = vsel %vm984, %v1074, 0.0
  %1118 = vadd.xlane.f32.xlu0 %v1117
  %v1119 = vpop.xlane.xlu0 %1118
  %v1120 = vsel %vm984, %v1076, 0.0
  %1121 = vadd.xlane.f32.xlu0 %v1120
  %v1122 = vpop.xlane.xlu0 %1121
  %v1123 = vsel %vm984, %v1078, 0.0
  %1124 = vadd.xlane.f32.xlu0 %v1123
  %v1125 = vpop.xlane.xlu0 %1124
  %v1126 = vsel %vm984, %v1080, 0.0
  %1127 = vadd.xlane.f32.xlu0 %v1126
  %v1128 = vpop.xlane.xlu0 %1127
  %v1129 = vrcp.pop %v1083
  %v1130 = vrcp.pop %v1086
  %v1131 = vrcp.pop %v1089
  %v1132 = vrcp.pop %v1092
  %v1133 = vrcp.pop %v1095
  %v1134 = vrcp.pop %v1098
  %v1135 = vrcp.pop %v1101
  %v1136 = vrcp.pop %v1104
  %v1137 = vrcp.pop %v1107
  %v1138 = vrcp.pop %v1110
  %v1139 = vrcp.pop %v1113
  %v1140 = vrcp.pop %v1116
  %v1141 = vrcp.pop %v1119
  %v1142 = vrcp.pop %v1122
  %v1143 = vrcp.pop %v1125
  %v1144 = vrcp.pop %v1128
  %v1145 = vmul.f32 %v1050, %v1129
  %v1146 = vmul.f32 %v1052, %v1130
  %v1147 = vmul.f32 %v1054, %v1131
  %v1148 = vmul.f32 %v1056, %v1132
  %v1149 = vmul.f32 %v1058, %v1133
  %v1150 = vmul.f32 %v1060, %v1134
  %v1151 = vmul.f32 %v1062, %v1135
  %v1152 = vmul.f32 %v1064, %v1136
  %v1153 = vmul.f32 %v1066, %v1137
  %v1154 = vmul.f32 %v1068, %v1138
  %v1155 = vmul.f32 %v1070, %v1139
  %v1156 = vmul.f32 %v1072, %v1140
  %v1157 = vmul.f32 %v1074, %v1141
  %v1158 = vmul.f32 %v1076, %v1142
  %v1159 = vmul.f32 %v1078, %v1143
  %v1160 = vmul.f32 %v1080, %v1144
  %1161 = vrot.lane.b32.xlu0 %v196, 64
  %v1162 = vpop.permute.xlu0 %1161
  %1163 = vrot.lane.b32.xlu0 %v201, 64
  %v1164 = vpop.permute.xlu0 %1163
  %v1168 = vsel %vm984, %v1145, 0
  %v1171 = vsel %vm984, %v1146, 0
  %1173 = vmatprep.subr.mxu0 0.0
  %1174 = vmatpush1.msra.mxu0 0.0
  %1175 = vmatprep.subr.mxu0 0.0
  %1176 = vmatpush1.msra.mxu0 0.0
  %1177 = vmatprep.subr.mxu0 0.0
  %1178 = vmatpush1.msra.mxu0 0.0
  %1179 = vmatprep.subr.mxu0 0.0
  %1180 = vmatpush1.msra.mxu0 0.0
  %1181 = vmatprep.subr.mxu0 0.0
  %1182 = vmatpush1.msra.mxu0 0.0
  %1183 = vmatprep.subr.mxu0 0.0
  %1184 = vmatpush1.msra.mxu0 0.0
  %1185 = vmatprep.subr.mxu0 0.0
  %1186 = vmatpush1.msra.mxu0 0.0
  %1187 = vmatprep.subr.mxu0 0.0
  %1188 = vmatpush1.msra.mxu0 0.0
  %1189 = vmatprep.subr.mxu0 0.0
  %1190 = vmatpush1.msra.mxu0 0.0
  %1191 = vmatprep.subr.mxu0 0.0
  %1192 = vmatpush1.msra.mxu0 0.0
  %1193 = vmatprep.subr.mxu0 0.0
  %1194 = vmatpush1.msra.mxu0 0.0
  %1195 = vmatprep.subr.mxu0 0.0
  %1196 = vmatpush1.msra.mxu0 0.0
  %1197 = vmatprep.subr.mxu0 0.0
  %1198 = vmatpush1.msra.mxu0 0.0
  %1199 = vmatprep.subr.mxu0 0.0
  %1200 = vmatpush1.msra.mxu0 0.0
  %1201 = vmatprep.subr.mxu0 0.0
  %1202 = vmatpush1.msra.mxu0 %v1164
  %1203 = vmatprep.subr.mxu0 0.0
  %1204 = vmatpush1.msra.mxu0 %v1162
  %1205 = vmatprep.subr.mxu0 0.0
  %1206 = vmatpush2.msra.mxu0 0.0
  %1207 = vmatprep.subr.mxu0 0.0
  %1208 = vmatpush2.msra.mxu0 0.0
  %1209 = vmatprep.subr.mxu0 0.0
  %1210 = vmatpush2.msra.mxu0 0.0
  %1211 = vmatprep.subr.mxu0 0.0
  %1212 = vmatpush2.msra.mxu0 0.0
  %1213 = vmatprep.subr.mxu0 0.0
  %1214 = vmatpush2.msra.mxu0 0.0
  %1215 = vmatprep.subr.mxu0 0.0
  %1216 = vmatpush2.msra.mxu0 0.0
  %1217 = vmatprep.subr.mxu0 0.0
  %1218 = vmatpush2.msra.mxu0 0.0
  %1219 = vmatprep.subr.mxu0 0.0
  %1220 = vmatpush2.msra.mxu0 0.0
  %1221 = vmatprep.subr.mxu0 0.0
  %1222 = vmatpush2.msra.mxu0 0.0
  %1223 = vmatprep.subr.mxu0 0.0
  %1224 = vmatpush2.msra.mxu0 0.0
  %1225 = vmatprep.subr.mxu0 0.0
  %1226 = vmatpush2.msra.mxu0 0.0
  %1227 = vmatprep.subr.mxu0 0.0
  %1228 = vmatpush2.msra.mxu0 0.0
  %1229 = vmatprep.subr.mxu0 0.0
  %1230 = vmatpush2.msra.mxu0 0.0
  %1231 = vmatprep.subr.mxu0 0.0
  %1232 = vmatpush2.msra.mxu0 0.0
  %1233 = vmatprep.subr.mxu0 0.0
  %1234 = vmatpush2.msra.mxu0 0.0
  %1235 = vmatprep.subr.mxu0 0.0
  %1236 = vmatpush2.msra.mxu0 0.0
  %1237 = vmatprep.mubr.f32.mxu0 0.0
  %1238 = vmatmul.mubr.f32.gmra.mxu0 %v1168
  %v1239 = vpop.f32.mrf.mxu0
  %v1240 = vadd.f32 0.0, %v1239
  %v1241 = vpop.f32.mrf.mxu0
  %1242 = vmatprep.mubr.f32.mxu0 0.0
  %1243 = vmatmul.mubr.f32.gmra.mxu0 %v1171
  %v1244 = vpop.f32.mrf.mxu0
  %v1245 = vadd.f32 0.0, %v1244
  %v1246 = vpop.f32.mrf.mxu0
  %1247 = vdwg.mxu0
  %1248 = vrot.lane.b32.xlu0 %v219, 64
  %v1249 = vpop.permute.xlu0 %1248
  %1250 = vrot.lane.b32.xlu0 %v221, 64
  %v1251 = vpop.permute.xlu0 %1250
  %v1255 = vsel %vm984, %v1147, 0
  %v1258 = vsel %vm984, %v1148, 0
  %1260 = vmatprep.subr.mxu0 0.0
  %1261 = vmatpush1.msra.mxu0 0.0
  %1262 = vmatprep.subr.mxu0 0.0
  %1263 = vmatpush1.msra.mxu0 0.0
  %1264 = vmatprep.subr.mxu0 0.0
  %1265 = vmatpush1.msra.mxu0 0.0
  %1266 = vmatprep.subr.mxu0 0.0
  %1267 = vmatpush1.msra.mxu0 0.0
  %1268 = vmatprep.subr.mxu0 0.0
  %1269 = vmatpush1.msra.mxu0 0.0
  %1270 = vmatprep.subr.mxu0 0.0
  %1271 = vmatpush1.msra.mxu0 0.0
  %1272 = vmatprep.subr.mxu0 0.0
  %1273 = vmatpush1.msra.mxu0 0.0
  %1274 = vmatprep.subr.mxu0 0.0
  %1275 = vmatpush1.msra.mxu0 0.0
  %1276 = vmatprep.subr.mxu0 0.0
  %1277 = vmatpush1.msra.mxu0 0.0
  %1278 = vmatprep.subr.mxu0 0.0
  %1279 = vmatpush1.msra.mxu0 0.0
  %1280 = vmatprep.subr.mxu0 0.0
  %1281 = vmatpush1.msra.mxu0 0.0
  %1282 = vmatprep.subr.mxu0 0.0
  %1283 = vmatpush1.msra.mxu0 0.0
  %1284 = vmatprep.subr.mxu0 0.0
  %1285 = vmatpush1.msra.mxu0 0.0
  %1286 = vmatprep.subr.mxu0 0.0
  %1287 = vmatpush1.msra.mxu0 0.0
  %1288 = vmatprep.subr.mxu0 0.0
  %1289 = vmatpush1.msra.mxu0 %v1251
  %1290 = vmatprep.subr.mxu0 0.0
  %1291 = vmatpush1.msra.mxu0 %v1249
  %1292 = vmatprep.subr.mxu0 0.0
  %1293 = vmatpush2.msra.mxu0 0.0
  %1294 = vmatprep.subr.mxu0 0.0
  %1295 = vmatpush2.msra.mxu0 0.0
  %1296 = vmatprep.subr.mxu0 0.0
  %1297 = vmatpush2.msra.mxu0 0.0
  %1298 = vmatprep.subr.mxu0 0.0
  %1299 = vmatpush2.msra.mxu0 0.0
  %1300 = vmatprep.subr.mxu0 0.0
  %1301 = vmatpush2.msra.mxu0 0.0
  %1302 = vmatprep.subr.mxu0 0.0
  %1303 = vmatpush2.msra.mxu0 0.0
  %1304 = vmatprep.subr.mxu0 0.0
  %1305 = vmatpush2.msra.mxu0 0.0
  %1306 = vmatprep.subr.mxu0 0.0
  %1307 = vmatpush2.msra.mxu0 0.0
  %1308 = vmatprep.subr.mxu0 0.0
  %1309 = vmatpush2.msra.mxu0 0.0
  %1310 = vmatprep.subr.mxu0 0.0
  %1311 = vmatpush2.msra.mxu0 0.0
  %1312 = vmatprep.subr.mxu0 0.0
  %1313 = vmatpush2.msra.mxu0 0.0
  %1314 = vmatprep.subr.mxu0 0.0
  %1315 = vmatpush2.msra.mxu0 0.0
  %1316 = vmatprep.subr.mxu0 0.0
  %1317 = vmatpush2.msra.mxu0 0.0
  %1318 = vmatprep.subr.mxu0 0.0
  %1319 = vmatpush2.msra.mxu0 0.0
  %1320 = vmatprep.subr.mxu0 0.0
  %1321 = vmatpush2.msra.mxu0 0.0
  %1322 = vmatprep.subr.mxu0 0.0
  %1323 = vmatpush2.msra.mxu0 0.0
  %1324 = vmatprep.mubr.f32.mxu0 0.0
  %1325 = vmatmul.mubr.f32.gmra.mxu0 %v1255
  %v1326 = vpop.f32.mrf.mxu0
  %v1327 = vadd.f32 0.0, %v1326
  %v1328 = vpop.f32.mrf.mxu0
  %1329 = vmatprep.mubr.f32.mxu0 0.0
  %1330 = vmatmul.mubr.f32.gmra.mxu0 %v1258
  %v1331 = vpop.f32.mrf.mxu0
  %v1332 = vadd.f32 0.0, %v1331
  %v1333 = vpop.f32.mrf.mxu0
  %1334 = vdwg.mxu0
  %1335 = vrot.lane.b32.xlu0 %v227, 64
  %v1336 = vpop.permute.xlu0 %1335
  %1337 = vrot.lane.b32.xlu0 %v229, 64
  %v1338 = vpop.permute.xlu0 %1337
  %v1342 = vsel %vm984, %v1149, 0
  %v1345 = vsel %vm984, %v1150, 0
  %1347 = vmatprep.subr.mxu0 0.0
  %1348 = vmatpush1.msra.mxu0 0.0
  %1349 = vmatprep.subr.mxu0 0.0
  %1350 = vmatpush1.msra.mxu0 0.0
  %1351 = vmatprep.subr.mxu0 0.0
  %1352 = vmatpush1.msra.mxu0 0.0
  %1353 = vmatprep.subr.mxu0 0.0
  %1354 = vmatpush1.msra.mxu0 0.0
  %1355 = vmatprep.subr.mxu0 0.0
  %1356 = vmatpush1.msra.mxu0 0.0
  %1357 = vmatprep.subr.mxu0 0.0
  %1358 = vmatpush1.msra.mxu0 0.0
  %1359 = vmatprep.subr.mxu0 0.0
  %1360 = vmatpush1.msra.mxu0 0.0
  %1361 = vmatprep.subr.mxu0 0.0
  %1362 = vmatpush1.msra.mxu0 0.0
  %1363 = vmatprep.subr.mxu0 0.0
  %1364 = vmatpush1.msra.mxu0 0.0
  %1365 = vmatprep.subr.mxu0 0.0
  %1366 = vmatpush1.msra.mxu0 0.0
  %1367 = vmatprep.subr.mxu0 0.0
  %1368 = vmatpush1.msra.mxu0 0.0
  %1369 = vmatprep.subr.mxu0 0.0
  %1370 = vmatpush1.msra.mxu0 0.0
  %1371 = vmatprep.subr.mxu0 0.0
  %1372 = vmatpush1.msra.mxu0 0.0
  %1373 = vmatprep.subr.mxu0 0.0
  %1374 = vmatpush1.msra.mxu0 0.0
  %1375 = vmatprep.subr.mxu0 0.0
  %1376 = vmatpush1.msra.mxu0 %v1338
  %1377 = vmatprep.subr.mxu0 0.0
  %1378 = vmatpush1.msra.mxu0 %v1336
  %1379 = vmatprep.subr.mxu0 0.0
  %1380 = vmatpush2.msra.mxu0 0.0
  %1381 = vmatprep.subr.mxu0 0.0
  %1382 = vmatpush2.msra.mxu0 0.0
  %1383 = vmatprep.subr.mxu0 0.0
  %1384 = vmatpush2.msra.mxu0 0.0
  %1385 = vmatprep.subr.mxu0 0.0
  %1386 = vmatpush2.msra.mxu0 0.0
  %1387 = vmatprep.subr.mxu0 0.0
  %1388 = vmatpush2.msra.mxu0 0.0
  %1389 = vmatprep.subr.mxu0 0.0
  %1390 = vmatpush2.msra.mxu0 0.0
  %1391 = vmatprep.subr.mxu0 0.0
  %1392 = vmatpush2.msra.mxu0 0.0
  %1393 = vmatprep.subr.mxu0 0.0
  %1394 = vmatpush2.msra.mxu0 0.0
  %1395 = vmatprep.subr.mxu0 0.0
  %1396 = vmatpush2.msra.mxu0 0.0
  %1397 = vmatprep.subr.mxu0 0.0
  %1398 = vmatpush2.msra.mxu0 0.0
  %1399 = vmatprep.subr.mxu0 0.0
  %1400 = vmatpush2.msra.mxu0 0.0
  %1401 = vmatprep.subr.mxu0 0.0
  %1402 = vmatpush2.msra.mxu0 0.0
  %1403 = vmatprep.subr.mxu0 0.0
  %1404 = vmatpush2.msra.mxu0 0.0
  %1405 = vmatprep.subr.mxu0 0.0
  %1406 = vmatpush2.msra.mxu0 0.0
  %1407 = vmatprep.subr.mxu0 0.0
  %1408 = vmatpush2.msra.mxu0 0.0
  %1409 = vmatprep.subr.mxu0 0.0
  %1410 = vmatpush2.msra.mxu0 0.0
  %1411 = vmatprep.mubr.f32.mxu0 0.0
  %1412 = vmatmul.mubr.f32.gmra.mxu0 %v1342
  %v1413 = vpop.f32.mrf.mxu0
  %v1414 = vadd.f32 0.0, %v1413
  %v1415 = vpop.f32.mrf.mxu0
  %1416 = vmatprep.mubr.f32.mxu0 0.0
  %1417 = vmatmul.mubr.f32.gmra.mxu0 %v1345
  %v1418 = vpop.f32.mrf.mxu0
  %v1419 = vadd.f32 0.0, %v1418
  %v1420 = vpop.f32.mrf.mxu0
  %1421 = vdwg.mxu0
  %1422 = vrot.lane.b32.xlu0 %v235, 64
  %v1423 = vpop.permute.xlu0 %1422
  %1424 = vrot.lane.b32.xlu0 %v237, 64
  %v1425 = vpop.permute.xlu0 %1424
  %v1429 = vsel %vm984, %v1151, 0
  %v1432 = vsel %vm984, %v1152, 0
  %1434 = vmatprep.subr.mxu0 0.0
  %1435 = vmatpush1.msra.mxu0 0.0
  %1436 = vmatprep.subr.mxu0 0.0
  %1437 = vmatpush1.msra.mxu0 0.0
  %1438 = vmatprep.subr.mxu0 0.0
  %1439 = vmatpush1.msra.mxu0 0.0
  %1440 = vmatprep.subr.mxu0 0.0
  %1441 = vmatpush1.msra.mxu0 0.0
  %1442 = vmatprep.subr.mxu0 0.0
  %1443 = vmatpush1.msra.mxu0 0.0
  %1444 = vmatprep.subr.mxu0 0.0
  %1445 = vmatpush1.msra.mxu0 0.0
  %1446 = vmatprep.subr.mxu0 0.0
  %1447 = vmatpush1.msra.mxu0 0.0
  %1448 = vmatprep.subr.mxu0 0.0
  %1449 = vmatpush1.msra.mxu0 0.0
  %1450 = vmatprep.subr.mxu0 0.0
  %1451 = vmatpush1.msra.mxu0 0.0
  %1452 = vmatprep.subr.mxu0 0.0
  %1453 = vmatpush1.msra.mxu0 0.0
  %1454 = vmatprep.subr.mxu0 0.0
  %1455 = vmatpush1.msra.mxu0 0.0
  %1456 = vmatprep.subr.mxu0 0.0
  %1457 = vmatpush1.msra.mxu0 0.0
  %1458 = vmatprep.subr.mxu0 0.0
  %1459 = vmatpush1.msra.mxu0 0.0
  %1460 = vmatprep.subr.mxu0 0.0
  %1461 = vmatpush1.msra.mxu0 0.0
  %1462 = vmatprep.subr.mxu0 0.0
  %1463 = vmatpush1.msra.mxu0 %v1425
  %1464 = vmatprep.subr.mxu0 0.0
  %1465 = vmatpush1.msra.mxu0 %v1423
  %1466 = vmatprep.subr.mxu0 0.0
  %1467 = vmatpush2.msra.mxu0 0.0
  %1468 = vmatprep.subr.mxu0 0.0
  %1469 = vmatpush2.msra.mxu0 0.0
  %1470 = vmatprep.subr.mxu0 0.0
  %1471 = vmatpush2.msra.mxu0 0.0
  %1472 = vmatprep.subr.mxu0 0.0
  %1473 = vmatpush2.msra.mxu0 0.0
  %1474 = vmatprep.subr.mxu0 0.0
  %1475 = vmatpush2.msra.mxu0 0.0
  %1476 = vmatprep.subr.mxu0 0.0
  %1477 = vmatpush2.msra.mxu0 0.0
  %1478 = vmatprep.subr.mxu0 0.0
  %1479 = vmatpush2.msra.mxu0 0.0
  %1480 = vmatprep.subr.mxu0 0.0
  %1481 = vmatpush2.msra.mxu0 0.0
  %1482 = vmatprep.subr.mxu0 0.0
  %1483 = vmatpush2.msra.mxu0 0.0
  %1484 = vmatprep.subr.mxu0 0.0
  %1485 = vmatpush2.msra.mxu0 0.0
  %1486 = vmatprep.subr.mxu0 0.0
  %1487 = vmatpush2.msra.mxu0 0.0
  %1488 = vmatprep.subr.mxu0 0.0
  %1489 = vmatpush2.msra.mxu0 0.0
  %1490 = vmatprep.subr.mxu0 0.0
  %1491 = vmatpush2.msra.mxu0 0.0
  %1492 = vmatprep.subr.mxu0 0.0
  %1493 = vmatpush2.msra.mxu0 0.0
  %1494 = vmatprep.subr.mxu0 0.0
  %1495 = vmatpush2.msra.mxu0 0.0
  %1496 = vmatprep.subr.mxu0 0.0
  %1497 = vmatpush2.msra.mxu0 0.0
  %1498 = vmatprep.mubr.f32.mxu0 0.0
  %1499 = vmatmul.mubr.f32.gmra.mxu0 %v1429
  %v1500 = vpop.f32.mrf.mxu0
  %v1501 = vadd.f32 0.0, %v1500
  %v1502 = vpop.f32.mrf.mxu0
  %1503 = vmatprep.mubr.f32.mxu0 0.0
  %1504 = vmatmul.mubr.f32.gmra.mxu0 %v1432
  %v1505 = vpop.f32.mrf.mxu0
  %v1506 = vadd.f32 0.0, %v1505
  %v1507 = vpop.f32.mrf.mxu0
  %1508 = vdwg.mxu0
  %1509 = vrot.lane.b32.xlu0 %v206, 64
  %v1510 = vpop.permute.xlu0 %1509
  %1511 = vrot.lane.b32.xlu0 %v211, 64
  %v1512 = vpop.permute.xlu0 %1511
  %v1516 = vsel %vm984, %v1153, 0
  %v1519 = vsel %vm984, %v1154, 0
  %1521 = vmatprep.subr.mxu0 0.0
  %1522 = vmatpush1.msra.mxu0 0.0
  %1523 = vmatprep.subr.mxu0 0.0
  %1524 = vmatpush1.msra.mxu0 0.0
  %1525 = vmatprep.subr.mxu0 0.0
  %1526 = vmatpush1.msra.mxu0 0.0
  %1527 = vmatprep.subr.mxu0 0.0
  %1528 = vmatpush1.msra.mxu0 0.0
  %1529 = vmatprep.subr.mxu0 0.0
  %1530 = vmatpush1.msra.mxu0 0.0
  %1531 = vmatprep.subr.mxu0 0.0
  %1532 = vmatpush1.msra.mxu0 0.0
  %1533 = vmatprep.subr.mxu0 0.0
  %1534 = vmatpush1.msra.mxu0 0.0
  %1535 = vmatprep.subr.mxu0 0.0
  %1536 = vmatpush1.msra.mxu0 0.0
  %1537 = vmatprep.subr.mxu0 0.0
  %1538 = vmatpush1.msra.mxu0 0.0
  %1539 = vmatprep.subr.mxu0 0.0
  %1540 = vmatpush1.msra.mxu0 0.0
  %1541 = vmatprep.subr.mxu0 0.0
  %1542 = vmatpush1.msra.mxu0 0.0
  %1543 = vmatprep.subr.mxu0 0.0
  %1544 = vmatpush1.msra.mxu0 0.0
  %1545 = vmatprep.subr.mxu0 0.0
  %1546 = vmatpush1.msra.mxu0 0.0
  %1547 = vmatprep.subr.mxu0 0.0
  %1548 = vmatpush1.msra.mxu0 0.0
  %1549 = vmatprep.subr.mxu0 0.0
  %1550 = vmatpush1.msra.mxu0 %v1512
  %1551 = vmatprep.subr.mxu0 0.0
  %1552 = vmatpush1.msra.mxu0 %v1510
  %1553 = vmatprep.subr.mxu0 0.0
  %1554 = vmatpush2.msra.mxu0 0.0
  %1555 = vmatprep.subr.mxu0 0.0
  %1556 = vmatpush2.msra.mxu0 0.0
  %1557 = vmatprep.subr.mxu0 0.0
  %1558 = vmatpush2.msra.mxu0 0.0
  %1559 = vmatprep.subr.mxu0 0.0
  %1560 = vmatpush2.msra.mxu0 0.0
  %1561 = vmatprep.subr.mxu0 0.0
  %1562 = vmatpush2.msra.mxu0 0.0
  %1563 = vmatprep.subr.mxu0 0.0
  %1564 = vmatpush2.msra.mxu0 0.0
  %1565 = vmatprep.subr.mxu0 0.0
  %1566 = vmatpush2.msra.mxu0 0.0
  %1567 = vmatprep.subr.mxu0 0.0
  %1568 = vmatpush2.msra.mxu0 0.0
  %1569 = vmatprep.subr.mxu0 0.0
  %1570 = vmatpush2.msra.mxu0 0.0
  %1571 = vmatprep.subr.mxu0 0.0
  %1572 = vmatpush2.msra.mxu0 0.0
  %1573 = vmatprep.subr.mxu0 0.0
  %1574 = vmatpush2.msra.mxu0 0.0
  %1575 = vmatprep.subr.mxu0 0.0
  %1576 = vmatpush2.msra.mxu0 0.0
  %1577 = vmatprep.subr.mxu0 0.0
  %1578 = vmatpush2.msra.mxu0 0.0
  %1579 = vmatprep.subr.mxu0 0.0
  %1580 = vmatpush2.msra.mxu0 0.0
  %1581 = vmatprep.subr.mxu0 0.0
  %1582 = vmatpush2.msra.mxu0 0.0
  %1583 = vmatprep.subr.mxu0 0.0
  %1584 = vmatpush2.msra.mxu0 0.0
  %1585 = vmatprep.mubr.f32.mxu0 0.0
  %1586 = vmatmul.mubr.f32.gmra.mxu0 %v1516
  %v1587 = vpop.f32.mrf.mxu0
  %v1588 = vadd.f32 0.0, %v1587
  %v1589 = vpop.f32.mrf.mxu0
  %1590 = vmatprep.mubr.f32.mxu0 0.0
  %1591 = vmatmul.mubr.f32.gmra.mxu0 %v1519
  %v1592 = vpop.f32.mrf.mxu0
  %v1593 = vadd.f32 0.0, %v1592
  %v1594 = vpop.f32.mrf.mxu0
  %1595 = vdwg.mxu0
  %1596 = vrot.lane.b32.xlu0 %v223, 64
  %v1597 = vpop.permute.xlu0 %1596
  %1598 = vrot.lane.b32.xlu0 %v225, 64
  %v1599 = vpop.permute.xlu0 %1598
  %v1603 = vsel %vm984, %v1155, 0
  %v1606 = vsel %vm984, %v1156, 0
  %1608 = vmatprep.subr.mxu0 0.0
  %1609 = vmatpush1.msra.mxu0 0.0
  %1610 = vmatprep.subr.mxu0 0.0
  %1611 = vmatpush1.msra.mxu0 0.0
  %1612 = vmatprep.subr.mxu0 0.0
  %1613 = vmatpush1.msra.mxu0 0.0
  %1614 = vmatprep.subr.mxu0 0.0
  %1615 = vmatpush1.msra.mxu0 0.0
  %1616 = vmatprep.subr.mxu0 0.0
  %1617 = vmatpush1.msra.mxu0 0.0
  %1618 = vmatprep.subr.mxu0 0.0
  %1619 = vmatpush1.msra.mxu0 0.0
  %1620 = vmatprep.subr.mxu0 0.0
  %1621 = vmatpush1.msra.mxu0 0.0
  %1622 = vmatprep.subr.mxu0 0.0
  %1623 = vmatpush1.msra.mxu0 0.0
  %1624 = vmatprep.subr.mxu0 0.0
  %1625 = vmatpush1.msra.mxu0 0.0
  %1626 = vmatprep.subr.mxu0 0.0
  %1627 = vmatpush1.msra.mxu0 0.0
  %1628 = vmatprep.subr.mxu0 0.0
  %1629 = vmatpush1.msra.mxu0 0.0
  %1630 = vmatprep.subr.mxu0 0.0
  %1631 = vmatpush1.msra.mxu0 0.0
  %1632 = vmatprep.subr.mxu0 0.0
  %1633 = vmatpush1.msra.mxu0 0.0
  %1634 = vmatprep.subr.mxu0 0.0
  %1635 = vmatpush1.msra.mxu0 0.0
  %1636 = vmatprep.subr.mxu0 0.0
  %1637 = vmatpush1.msra.mxu0 %v1599
  %1638 = vmatprep.subr.mxu0 0.0
  %1639 = vmatpush1.msra.mxu0 %v1597
  %1640 = vmatprep.subr.mxu0 0.0
  %1641 = vmatpush2.msra.mxu0 0.0
  %1642 = vmatprep.subr.mxu0 0.0
  %1643 = vmatpush2.msra.mxu0 0.0
  %1644 = vmatprep.subr.mxu0 0.0
  %1645 = vmatpush2.msra.mxu0 0.0
  %1646 = vmatprep.subr.mxu0 0.0
  %1647 = vmatpush2.msra.mxu0 0.0
  %1648 = vmatprep.subr.mxu0 0.0
  %1649 = vmatpush2.msra.mxu0 0.0
  %1650 = vmatprep.subr.mxu0 0.0
  %1651 = vmatpush2.msra.mxu0 0.0
  %1652 = vmatprep.subr.mxu0 0.0
  %1653 = vmatpush2.msra.mxu0 0.0
  %1654 = vmatprep.subr.mxu0 0.0
  %1655 = vmatpush2.msra.mxu0 0.0
  %1656 = vmatprep.subr.mxu0 0.0
  %1657 = vmatpush2.msra.mxu0 0.0
  %1658 = vmatprep.subr.mxu0 0.0
  %1659 = vmatpush2.msra.mxu0 0.0
  %1660 = vmatprep.subr.mxu0 0.0
  %1661 = vmatpush2.msra.mxu0 0.0
  %1662 = vmatprep.subr.mxu0 0.0
  %1663 = vmatpush2.msra.mxu0 0.0
  %1664 = vmatprep.subr.mxu0 0.0
  %1665 = vmatpush2.msra.mxu0 0.0
  %1666 = vmatprep.subr.mxu0 0.0
  %1667 = vmatpush2.msra.mxu0 0.0
  %1668 = vmatprep.subr.mxu0 0.0
  %1669 = vmatpush2.msra.mxu0 0.0
  %1670 = vmatprep.subr.mxu0 0.0
  %1671 = vmatpush2.msra.mxu0 0.0
  %1672 = vmatprep.mubr.f32.mxu0 0.0
  %1673 = vmatmul.mubr.f32.gmra.mxu0 %v1603
  %v1674 = vpop.f32.mrf.mxu0
  %v1675 = vadd.f32 0.0, %v1674
  %v1676 = vpop.f32.mrf.mxu0
  %1677 = vmatprep.mubr.f32.mxu0 0.0
  %1678 = vmatmul.mubr.f32.gmra.mxu0 %v1606
  %v1679 = vpop.f32.mrf.mxu0
  %v1680 = vadd.f32 0.0, %v1679
  %v1681 = vpop.f32.mrf.mxu0
  %1682 = vdwg.mxu0
  %1683 = vrot.lane.b32.xlu0 %v231, 64
  %v1684 = vpop.permute.xlu0 %1683
  %1685 = vrot.lane.b32.xlu0 %v233, 64
  %v1686 = vpop.permute.xlu0 %1685
  %v1690 = vsel %vm984, %v1157, 0
  %v1693 = vsel %vm984, %v1158, 0
  %1695 = vmatprep.subr.mxu0 0.0
  %1696 = vmatpush1.msra.mxu0 0.0
  %1697 = vmatprep.subr.mxu0 0.0
  %1698 = vmatpush1.msra.mxu0 0.0
  %1699 = vmatprep.subr.mxu0 0.0
  %1700 = vmatpush1.msra.mxu0 0.0
  %1701 = vmatprep.subr.mxu0 0.0
  %1702 = vmatpush1.msra.mxu0 0.0
  %1703 = vmatprep.subr.mxu0 0.0
  %1704 = vmatpush1.msra.mxu0 0.0
  %1705 = vmatprep.subr.mxu0 0.0
  %1706 = vmatpush1.msra.mxu0 0.0
  %1707 = vmatprep.subr.mxu0 0.0
  %1708 = vmatpush1.msra.mxu0 0.0
  %1709 = vmatprep.subr.mxu0 0.0
  %1710 = vmatpush1.msra.mxu0 0.0
  %1711 = vmatprep.subr.mxu0 0.0
  %1712 = vmatpush1.msra.mxu0 0.0
  %1713 = vmatprep.subr.mxu0 0.0
  %1714 = vmatpush1.msra.mxu0 0.0
  %1715 = vmatprep.subr.mxu0 0.0
  %1716 = vmatpush1.msra.mxu0 0.0
  %1717 = vmatprep.subr.mxu0 0.0
  %1718 = vmatpush1.msra.mxu0 0.0
  %1719 = vmatprep.subr.mxu0 0.0
  %1720 = vmatpush1.msra.mxu0 0.0
  %1721 = vmatprep.subr.mxu0 0.0
  %1722 = vmatpush1.msra.mxu0 0.0
  %1723 = vmatprep.subr.mxu0 0.0
  %1724 = vmatpush1.msra.mxu0 %v1686
  %1725 = vmatprep.subr.mxu0 0.0
  %1726 = vmatpush1.msra.mxu0 %v1684
  %1727 = vmatprep.subr.mxu0 0.0
  %1728 = vmatpush2.msra.mxu0 0.0
  %1729 = vmatprep.subr.mxu0 0.0
  %1730 = vmatpush2.msra.mxu0 0.0
  %1731 = vmatprep.subr.mxu0 0.0
  %1732 = vmatpush2.msra.mxu0 0.0
  %1733 = vmatprep.subr.mxu0 0.0
  %1734 = vmatpush2.msra.mxu0 0.0
  %1735 = vmatprep.subr.mxu0 0.0
  %1736 = vmatpush2.msra.mxu0 0.0
  %1737 = vmatprep.subr.mxu0 0.0
  %1738 = vmatpush2.msra.mxu0 0.0
  %1739 = vmatprep.subr.mxu0 0.0
  %1740 = vmatpush2.msra.mxu0 0.0
  %1741 = vmatprep.subr.mxu0 0.0
  %1742 = vmatpush2.msra.mxu0 0.0
  %1743 = vmatprep.subr.mxu0 0.0
  %1744 = vmatpush2.msra.mxu0 0.0
  %1745 = vmatprep.subr.mxu0 0.0
  %1746 = vmatpush2.msra.mxu0 0.0
  %1747 = vmatprep.subr.mxu0 0.0
  %1748 = vmatpush2.msra.mxu0 0.0
  %1749 = vmatprep.subr.mxu0 0.0
  %1750 = vmatpush2.msra.mxu0 0.0
  %1751 = vmatprep.subr.mxu0 0.0
  %1752 = vmatpush2.msra.mxu0 0.0
  %1753 = vmatprep.subr.mxu0 0.0
  %1754 = vmatpush2.msra.mxu0 0.0
  %1755 = vmatprep.subr.mxu0 0.0
  %1756 = vmatpush2.msra.mxu0 0.0
  %1757 = vmatprep.subr.mxu0 0.0
  %1758 = vmatpush2.msra.mxu0 0.0
  %1759 = vmatprep.mubr.f32.mxu0 0.0
  %1760 = vmatmul.mubr.f32.gmra.mxu0 %v1690
  %v1761 = vpop.f32.mrf.mxu0
  %v1762 = vadd.f32 0.0, %v1761
  %v1763 = vpop.f32.mrf.mxu0
  %1764 = vmatprep.mubr.f32.mxu0 0.0
  %1765 = vmatmul.mubr.f32.gmra.mxu0 %v1693
  %v1766 = vpop.f32.mrf.mxu0
  %v1767 = vadd.f32 0.0, %v1766
  %v1768 = vpop.f32.mrf.mxu0
  %1769 = vdwg.mxu0
  %1770 = vrot.lane.b32.xlu0 %v239, 64
  %v1771 = vpop.permute.xlu0 %1770
  %1772 = vrot.lane.b32.xlu0 %v241, 64
  %v1773 = vpop.permute.xlu0 %1772
  %v1777 = vsel %vm984, %v1159, 0
  %v1780 = vsel %vm984, %v1160, 0
  %1782 = vmatprep.subr.mxu0 0.0
  %1783 = vmatpush1.msra.mxu0 0.0
  %1784 = vmatprep.subr.mxu0 0.0
  %1785 = vmatpush1.msra.mxu0 0.0
  %1786 = vmatprep.subr.mxu0 0.0
  %1787 = vmatpush1.msra.mxu0 0.0
  %1788 = vmatprep.subr.mxu0 0.0
  %1789 = vmatpush1.msra.mxu0 0.0
  %1790 = vmatprep.subr.mxu0 0.0
  %1791 = vmatpush1.msra.mxu0 0.0
  %1792 = vmatprep.subr.mxu0 0.0
  %1793 = vmatpush1.msra.mxu0 0.0
  %1794 = vmatprep.subr.mxu0 0.0
  %1795 = vmatpush1.msra.mxu0 0.0
  %1796 = vmatprep.subr.mxu0 0.0
  %1797 = vmatpush1.msra.mxu0 0.0
  %1798 = vmatprep.subr.mxu0 0.0
  %1799 = vmatpush1.msra.mxu0 0.0
  %1800 = vmatprep.subr.mxu0 0.0
  %1801 = vmatpush1.msra.mxu0 0.0
  %1802 = vmatprep.subr.mxu0 0.0
  %1803 = vmatpush1.msra.mxu0 0.0
  %1804 = vmatprep.subr.mxu0 0.0
  %1805 = vmatpush1.msra.mxu0 0.0
  %1806 = vmatprep.subr.mxu0 0.0
  %1807 = vmatpush1.msra.mxu0 0.0
  %1808 = vmatprep.subr.mxu0 0.0
  %1809 = vmatpush1.msra.mxu0 0.0
  %1810 = vmatprep.subr.mxu0 0.0
  %1811 = vmatpush1.msra.mxu0 %v1773
  %1812 = vmatprep.subr.mxu0 0.0
  %1813 = vmatpush1.msra.mxu0 %v1771
  %1814 = vmatprep.subr.mxu0 0.0
  %1815 = vmatpush2.msra.mxu0 0.0
  %1816 = vmatprep.subr.mxu0 0.0
  %1817 = vmatpush2.msra.mxu0 0.0
  %1818 = vmatprep.subr.mxu0 0.0
  %1819 = vmatpush2.msra.mxu0 0.0
  %1820 = vmatprep.subr.mxu0 0.0
  %1821 = vmatpush2.msra.mxu0 0.0
  %1822 = vmatprep.subr.mxu0 0.0
  %1823 = vmatpush2.msra.mxu0 0.0
  %1824 = vmatprep.subr.mxu0 0.0
  %1825 = vmatpush2.msra.mxu0 0.0
  %1826 = vmatprep.subr.mxu0 0.0
  %1827 = vmatpush2.msra.mxu0 0.0
  %1828 = vmatprep.subr.mxu0 0.0
  %1829 = vmatpush2.msra.mxu0 0.0
  %1830 = vmatprep.subr.mxu0 0.0
  %1831 = vmatpush2.msra.mxu0 0.0
  %1832 = vmatprep.subr.mxu0 0.0
  %1833 = vmatpush2.msra.mxu0 0.0
  %1834 = vmatprep.subr.mxu0 0.0
  %1835 = vmatpush2.msra.mxu0 0.0
  %1836 = vmatprep.subr.mxu0 0.0
  %1837 = vmatpush2.msra.mxu0 0.0
  %1838 = vmatprep.subr.mxu0 0.0
  %1839 = vmatpush2.msra.mxu0 0.0
  %1840 = vmatprep.subr.mxu0 0.0
  %1841 = vmatpush2.msra.mxu0 0.0
  %1842 = vmatprep.subr.mxu0 0.0
  %1843 = vmatpush2.msra.mxu0 0.0
  %1844 = vmatprep.subr.mxu0 0.0
  %1845 = vmatpush2.msra.mxu0 0.0
  %1846 = vmatprep.mubr.f32.mxu0 0.0
  %1847 = vmatmul.mubr.f32.gmra.mxu0 %v1777
  %v1848 = vpop.f32.mrf.mxu0
  %v1849 = vadd.f32 0.0, %v1848
  %v1850 = vpop.f32.mrf.mxu0
  %1851 = vmatprep.mubr.f32.mxu0 0.0
  %1852 = vmatmul.mubr.f32.gmra.mxu0 %v1780
  %v1853 = vpop.f32.mrf.mxu0
  %v1854 = vadd.f32 0.0, %v1853
  %v1855 = vpop.f32.mrf.mxu0
  %1856 = vdwg.mxu0
  %1861 = vrot.lane.b32.xlu0 %v1327, 8
  %v1862 = vpop.permute.xlu0 %1861
  %1863 = vrot.lane.b32.xlu0 %v1332, 8
  %v1864 = vpop.permute.xlu0 %1863
  %1865 = vrot.lane.b32.xlu0 %v1675, 8
  %v1866 = vpop.permute.xlu0 %1865
  %1867 = vrot.lane.b32.xlu0 %v1680, 8
  %v1868 = vpop.permute.xlu0 %1867
  %1877 = vrot.lane.b32.xlu0 %v1414, 16
  %v1878 = vpop.permute.xlu0 %1877
  %1879 = vrot.lane.b32.xlu0 %v1419, 16
  %v1880 = vpop.permute.xlu0 %1879
  %1881 = vrot.lane.b32.xlu0 %v1762, 16
  %v1882 = vpop.permute.xlu0 %1881
  %1883 = vrot.lane.b32.xlu0 %v1767, 16
  %v1884 = vpop.permute.xlu0 %1883
  %1893 = vrot.lane.b32.xlu0 %v1501, 24
  %v1894 = vpop.permute.xlu0 %1893
  %1895 = vrot.lane.b32.xlu0 %v1506, 24
  %v1896 = vpop.permute.xlu0 %1895
  %1897 = vrot.lane.b32.xlu0 %v1849, 24
  %v1898 = vpop.permute.xlu0 %1897
  %1899 = vrot.lane.b32.xlu0 %v1854, 24
  %v1900 = vpop.permute.xlu0 %1899
  %v1905 = vsel %vm246, %v1240, %v1862
  %v1906 = vsel %vm246, %v1245, %v1864
  %v1907 = vsel %vm246, %v1588, %v1866
  %v1908 = vsel %vm246, %v1593, %v1868
  %v1909 = vsel %vm984, %v1905, %v1878
  %v1910 = vsel %vm984, %v1906, %v1880
  %v1911 = vsel %vm984, %v1907, %v1882
  %v1912 = vsel %vm984, %v1908, %v1884
  %vm1913 = vcmask 195584
  %v1914 = vsel %vm1913, %v1909, %v1894
  %v1915 = vsel %vm1913, %v1910, %v1896
  %v1916 = vsel %vm1913, %v1911, %v1898
  %v1917 = vsel %vm1913, %v1912, %v1900
  %v1918 = vld [vmem:[%s4] sm:$0xff]
  %v1919 = vld [vmem:[%s4 + $0x8] sm:$0xff]
  %v1920 = vld [vmem:[%s4 + $0x10] sm:$0xff]
  %v1921 = vld [vmem:[%s4 + $0x18] sm:$0xff]
  %v1922 = vld [vmem:[%s5] sm:$0x1]
  %v1924 = vlaneseq
  %v1925 = vshrl.u32 %v1924, 7
  %v1926 = vsub.s32 0, %v1925
  %v1927 = vrot.slane %v1922, %v1926
  %v1930 = vsel %vm116, %v1914, 0
  %v1933 = vsel %vm116, %v1915, 0
  %v1936 = vsel %vm116, %v1916, 0
  %v1939 = vsel %vm116, %v1917, 0
  %1941 = vmatprep.subr.mxu0 0.0
  %1942 = vmatpush1.msra.mxu0 0.0
  %1943 = vmatprep.subr.mxu0 0.0
  %1944 = vmatpush1.msra.mxu0 0.0
  %1945 = vmatprep.subr.mxu0 0.0
  %1946 = vmatpush1.msra.mxu0 0.0
  %1947 = vmatprep.subr.mxu0 0.0
  %1948 = vmatpush1.msra.mxu0 0.0
  %1949 = vmatprep.subr.mxu0 0.0
  %1950 = vmatpush1.msra.mxu0 0.0
  %1951 = vmatprep.subr.mxu0 0.0
  %1952 = vmatpush1.msra.mxu0 0.0
  %1953 = vmatprep.subr.mxu0 0.0
  %1954 = vmatpush1.msra.mxu0 0.0
  %1955 = vmatprep.subr.mxu0 0.0
  %1956 = vmatpush1.msra.mxu0 0.0
  %1957 = vmatprep.subr.mxu0 0.0
  %1958 = vmatpush1.msra.mxu0 0.0
  %1959 = vmatprep.subr.mxu0 0.0
  %1960 = vmatpush1.msra.mxu0 0.0
  %1961 = vmatprep.subr.mxu0 0.0
  %1962 = vmatpush1.msra.mxu0 0.0
  %1963 = vmatprep.subr.mxu0 0.0
  %1964 = vmatpush1.msra.mxu0 0.0
  %1965 = vmatprep.subr.mxu0 0.0
  %1966 = vmatpush1.msra.mxu0 %v1921
  %1967 = vmatprep.subr.mxu0 0.0
  %1968 = vmatpush1.msra.mxu0 %v1920
  %1969 = vmatprep.subr.mxu0 0.0
  %1970 = vmatpush1.msra.mxu0 %v1919
  %1971 = vmatprep.subr.mxu0 0.0
  %1972 = vmatpush1.msra.mxu0 %v1918
  %1973 = vmatprep.subr.mxu0 0.0
  %1974 = vmatpush2.msra.mxu0 0.0
  %1975 = vmatprep.subr.mxu0 0.0
  %1976 = vmatpush2.msra.mxu0 0.0
  %1977 = vmatprep.subr.mxu0 0.0
  %1978 = vmatpush2.msra.mxu0 0.0
  %1979 = vmatprep.subr.mxu0 0.0
  %1980 = vmatpush2.msra.mxu0 0.0
  %1981 = vmatprep.subr.mxu0 0.0
  %1982 = vmatpush2.msra.mxu0 0.0
  %1983 = vmatprep.subr.mxu0 0.0
  %1984 = vmatpush2.msra.mxu0 0.0
  %1985 = vmatprep.subr.mxu0 0.0
  %1986 = vmatpush2.msra.mxu0 0.0
  %1987 = vmatprep.subr.mxu0 0.0
  %1988 = vmatpush2.msra.mxu0 0.0
  %1989 = vmatprep.subr.mxu0 0.0
  %1990 = vmatpush2.msra.mxu0 0.0
  %1991 = vmatprep.subr.mxu0 0.0
  %1992 = vmatpush2.msra.mxu0 0.0
  %1993 = vmatprep.subr.mxu0 0.0
  %1994 = vmatpush2.msra.mxu0 0.0
  %1995 = vmatprep.subr.mxu0 0.0
  %1996 = vmatpush2.msra.mxu0 0.0
  %1997 = vmatprep.subr.mxu0 0.0
  %1998 = vmatpush2.msra.mxu0 0.0
  %1999 = vmatprep.subr.mxu0 0.0
  %2000 = vmatpush2.msra.mxu0 0.0
  %2001 = vmatprep.subr.mxu0 0.0
  %2002 = vmatpush2.msra.mxu0 0.0
  %2003 = vmatprep.subr.mxu0 0.0
  %2004 = vmatpush2.msra.mxu0 0.0
  %2005 = vmatprep.mubr.f32.mxu0 0.0
  %2006 = vmatmul.mubr.f32.gmra.mxu0 %v1930
  %v2007 = vpop.f32.mrf.mxu0
  %v2008 = vadd.f32 %v1927, %v2007
  %v2009 = vpop.f32.mrf.mxu0
  %2010 = vmatprep.mubr.f32.mxu0 0.0
  %2011 = vmatmul.mubr.f32.gmra.mxu0 %v1933
  %v2012 = vpop.f32.mrf.mxu0
  %v2013 = vadd.f32 %v1927, %v2012
  %v2014 = vpop.f32.mrf.mxu0
  %2015 = vmatprep.mubr.f32.mxu0 0.0
  %2016 = vmatmul.mubr.f32.gmra.mxu0 %v1936
  %v2017 = vpop.f32.mrf.mxu0
  %v2018 = vadd.f32 %v1927, %v2017
  %v2019 = vpop.f32.mrf.mxu0
  %2020 = vmatprep.mubr.f32.mxu0 0.0
  %2021 = vmatmul.mubr.f32.gmra.mxu0 %v1939
  %v2022 = vpop.f32.mrf.mxu0
  %v2023 = vadd.f32 %v1927, %v2022
  %v2024 = vpop.f32.mrf.mxu0
  %2025 = vdwg.mxu0
  %v2026 = vadd.f32 %v57, %v2008
  %v2027 = vadd.f32 %v58, %v2013
  %v2028 = vadd.f32 %v89, %v2018
  %v2029 = vadd.f32 %v90, %v2023
  %v2030 = vsel %vm116, %v2026, 0.0
  %2031 = vadd.xlane.f32.xlu0 %v2030
  %v2032 = vpop.xlane.xlu0 %2031
  %v2033 = vsel %vm116, %v2027, 0.0
  %2034 = vadd.xlane.f32.xlu0 %v2033
  %v2035 = vpop.xlane.xlu0 %2034
  %v2036 = vsel %vm116, %v2028, 0.0
  %2037 = vadd.xlane.f32.xlu0 %v2036
  %v2038 = vpop.xlane.xlu0 %2037
  %v2039 = vsel %vm116, %v2029, 0.0
  %2040 = vadd.xlane.f32.xlu0 %v2039
  %v2041 = vpop.xlane.xlu0 %2040
  %v2042 = vrcp.pop 32.0
  %v2043 = vmul.f32 %v2032, %v2042
  %v2044 = vmul.f32 %v2035, %v2042
  %v2045 = vmul.f32 %v2038, %v2042
  %v2046 = vmul.f32 %v2041, %v2042
  %v2047 = vsub.f32 %v2026, %v2043
  %v2048 = vsub.f32 %v2027, %v2044
  %v2049 = vsub.f32 %v2028, %v2045
  %v2050 = vsub.f32 %v2029, %v2046
  %v2051 = vmul.f32 %v2047, %v2047
  %v2052 = vmul.f32 %v2048, %v2048
  %v2053 = vmul.f32 %v2049, %v2049
  %v2054 = vmul.f32 %v2050, %v2050
  %v2055 = vsel %vm116, %v2051, 0.0
  %2056 = vadd.xlane.f32.xlu0 %v2055
  %v2057 = vpop.xlane.xlu0 %2056
  %v2058 = vsel %vm116, %v2052, 0.0
  %2059 = vadd.xlane.f32.xlu0 %v2058
  %v2060 = vpop.xlane.xlu0 %2059
  %v2061 = vsel %vm116, %v2053, 0.0
  %2062 = vadd.xlane.f32.xlu0 %v2061
  %v2063 = vpop.xlane.xlu0 %2062
  %v2064 = vsel %vm116, %v2054, 0.0
  %2065 = vadd.xlane.f32.xlu0 %v2064
  %v2066 = vpop.xlane.xlu0 %2065
  %v2067 = vmul.f32 %v2057, %v2042
  %v2068 = vmul.f32 %v2060, %v2042
  %v2069 = vmul.f32 %v2063, %v2042
  %v2070 = vmul.f32 %v2066, %v2042
  %v2071 = vadd.f32 %v2067, 1e-05
  %v2072 = vadd.f32 %v2068, 1e-05
  %v2073 = vadd.f32 %v2069, 1e-05
  %v2074 = vadd.f32 %v2070, 1e-05
  %v2075 = vrsqrt.pop %v2071
  %v2076 = vrsqrt.pop %v2072
  %v2077 = vrsqrt.pop %v2073
  %v2078 = vrsqrt.pop %v2074
  %v2079 = vmul.f32 %v2047, %v2075
  %v2080 = vmul.f32 %v2048, %v2076
  %v2081 = vmul.f32 %v2049, %v2077
  %v2082 = vmul.f32 %v2050, %v2078
  %v2083 = vld [vmem:[%s6] sm:$0x1]
  %v2085 = vlaneseq
  %v2086 = vshrl.u32 %v2085, 7
  %v2087 = vsub.s32 0, %v2086
  %v2088 = vrot.slane %v2083, %v2087
  %v2090 = vmul.f32 %v2079, %v2088
  %v2091 = vmul.f32 %v2080, %v2088
  %v2092 = vmul.f32 %v2081, %v2088
  %v2093 = vmul.f32 %v2082, %v2088
  %v2094 = vld [vmem:[%s7] sm:$0x1]
  %v2096 = vlaneseq
  %v2097 = vshrl.u32 %v2096, 7
  %v2098 = vsub.s32 0, %v2097
  %v2099 = vrot.slane %v2094, %v2098
  %v2101 = vadd.f32 %v2090, %v2099
  %v2102 = vadd.f32 %v2091, %v2099
  %v2103 = vadd.f32 %v2092, %v2099
  %v2104 = vadd.f32 %v2093, %v2099
  %2105 = vxpose.xlu0.b32.start [1/16] %v2101, 128
  %2106 = vxpose.xlu0.b32.cont [2/16] %v2102, 128
  %2107 = vxpose.xlu0.b32.cont [3/16] 0.0, 128
  %2108 = vxpose.xlu0.b32.cont [4/16] 0.0, 128
  %2109 = vxpose.xlu0.b32.cont [5/16] 0.0, 128
  %2110 = vxpose.xlu0.b32.cont [6/16] 0.0, 128
  %2111 = vxpose.xlu0.b32.cont [7/16] 0.0, 128
  %2112 = vxpose.xlu0.b32.cont [8/16] 0.0, 128
  %2113 = vxpose.xlu0.b32.cont [9/16] 0.0, 128
  %2114 = vxpose.xlu0.b32.cont [10/16] 0.0, 128
  %2115 = vxpose.xlu0.b32.cont [11/16] 0.0, 128
  %2116 = vxpose.xlu0.b32.cont [12/16] 0.0, 128
  %2117 = vxpose.xlu0.b32.cont [13/16] 0.0, 128
  %2118 = vxpose.xlu0.b32.cont [14/16] 0.0, 128
  %2119 = vxpose.xlu0.b32.cont [15/16] 0.0, 128
  %2120 = vxpose.xlu0.b32.end [16/16] 0.0, 128
  %v2121 = vpop.trf.xlu0
  %v2122 = vpop.trf.xlu0
  %v2123 = vpop.trf.xlu0
  %v2124 = vpop.trf.xlu0
  %v2125 = vpop.trf.xlu0
  %v2126 = vpop.trf.xlu0
  %v2127 = vpop.trf.xlu0
  %v2128 = vpop.trf.xlu0
  %v2129 = vpop.trf.xlu0
  %v2130 = vpop.trf.xlu0
  %v2131 = vpop.trf.xlu0
  %v2132 = vpop.trf.xlu0
  %v2133 = vpop.trf.xlu0
  %v2134 = vpop.trf.xlu0
  %v2135 = vpop.trf.xlu0
  %v2136 = vpop.trf.xlu0
  %2137 = vxpose.xlu0.b32.start [1/16] %v2103, 128
  %2138 = vxpose.xlu0.b32.cont [2/16] %v2104, 128
  %2139 = vxpose.xlu0.b32.cont [3/16] 0.0, 128
  %2140 = vxpose.xlu0.b32.cont [4/16] 0.0, 128
  %2141 = vxpose.xlu0.b32.cont [5/16] 0.0, 128
  %2142 = vxpose.xlu0.b32.cont [6/16] 0.0, 128
  %2143 = vxpose.xlu0.b32.cont [7/16] 0.0, 128
  %2144 = vxpose.xlu0.b32.cont [8/16] 0.0, 128
  %2145 = vxpose.xlu0.b32.cont [9/16] 0.0, 128
  %2146 = vxpose.xlu0.b32.cont [10/16] 0.0, 128
  %2147 = vxpose.xlu0.b32.cont [11/16] 0.0, 128
  %2148 = vxpose.xlu0.b32.cont [12/16] 0.0, 128
  %2149 = vxpose.xlu0.b32.cont [13/16] 0.0, 128
  %2150 = vxpose.xlu0.b32.cont [14/16] 0.0, 128
  %2151 = vxpose.xlu0.b32.cont [15/16] 0.0, 128
  %2152 = vxpose.xlu0.b32.end [16/16] 0.0, 128
  %v2153 = vpop.trf.xlu0
  %v2154 = vpop.trf.xlu0
  %v2155 = vpop.trf.xlu0
  %v2156 = vpop.trf.xlu0
  %v2157 = vpop.trf.xlu0
  %v2158 = vpop.trf.xlu0
  %v2159 = vpop.trf.xlu0
  %v2160 = vpop.trf.xlu0
  %v2161 = vpop.trf.xlu0
  %v2162 = vpop.trf.xlu0
  %v2163 = vpop.trf.xlu0
  %v2164 = vpop.trf.xlu0
  %v2165 = vpop.trf.xlu0
  %v2166 = vpop.trf.xlu0
  %v2167 = vpop.trf.xlu0
  %v2168 = vpop.trf.xlu0
  %2169 = vst.msk [vmem:[%s8] sm:$0xff] %vm984, %v2121
  %2170 = vst.msk [vmem:[%s8 + $0x8] sm:$0xff] %vm984, %v2122
  %2171 = vst.msk [vmem:[%s8 + $0x10] sm:$0xff] %vm984, %v2123
  %2172 = vst.msk [vmem:[%s8 + $0x18] sm:$0xff] %vm984, %v2124
  %2173 = vst.msk [vmem:[%s8 + $0x20] sm:$0xff] %vm984, %v2153
  %2174 = vst.msk [vmem:[%s8 + $0x28] sm:$0xff] %vm984, %v2154
  %2175 = vst.msk [vmem:[%s8 + $0x30] sm:$0xff] %vm984, %v2155
  %2176 = vst.msk [vmem:[%s8 + $0x38] sm:$0xff] %vm984, %v2156
  // Predicated region
  $region30: #{tpu_custom_call.1} parent=0 // pred_check
    _
  $region31: #{tpu_custom_call.1} parent=0 // pred_check_branch
    %2178 = sbr.rel (0) target = $region33
  $region32: #{tpu_custom_call.1} parent=0 // pred_region
    _
  $region33: #{tpu_custom_call.1} parent=0 // pred_fallthru
    _
  // Predicated region
  $region34: #{tpu_custom_call.1} parent=0 // pred_check
    _
  $region35: #{tpu_custom_call.1} parent=0 // pred_check_branch
    %2180 = sbr.rel (0) target = $region37
  $region36: #{tpu_custom_call.1} parent=0 // pred_region
    _
  $region37: #{tpu_custom_call.1} parent=0 // pred_fallthru
    _

</llo_original>
